<compile_context>
chip_gen: v5e
topology: v5e:2x2
jax: 0.10.0
libtpu: 0.0.40
codegen_flags: <defaults>
</compile_context>

<pallas_src>
import functools

import jax
import jax.numpy as jnp
from jax.experimental import pallas as pl
from jax.experimental.pallas import tpu as pltpu

HIDDEN = 300       # fixed by the module definition
HIDDEN_PAD = 384   # 3 * 128: lane/sublane-aligned padding of the hidden dim
LANE = 128


def _round_up(x, m):
    return (x + m - 1) // m * m


def _choose_batch_tile(B, batch_tile):
    """Batch tile: multiple of 8 always; multiple of 128 (and >=2 grid steps) when large."""
    B8 = _round_up(B, 8)
    if B8 < 256:
        return B8                                   # tiny batch: one grid step, no wasted rows
    n_steps = max(2, -(-B8 // batch_tile))          # >=2 steps so v7x megacore can split the batch
    bt = -(-B8 // n_steps)
    return _round_up(bt, 128)                       # fill whole 128-row MXU M passes


def _vmem_limit_bytes(bt, in_pad, out_pad, w_itemsize, weight_buffers):
    """Scoped-VMEM request sized from the actual resident buffers (+25% headroom)."""
    x_tile = bt * in_pad * w_itemsize * 2                       # double-buffered input tile
    out_tile = bt * out_pad * 4 * 2                             # f32 output tile, double-buffered
    weights = (in_pad * HIDDEN_PAD + HIDDEN_PAD * HIDDEN_PAD
               + HIDDEN_PAD * out_pad) * w_itemsize
    biases = (2 * HIDDEN_PAD + out_pad) * 4
    resident = (weights + biases) * weight_buffers
    live = bt * HIDDEN_PAD * 4 * 4                              # h1/h2/z/cast temporaries
    need = x_tile + out_tile + resident + live
    return int(min(max(need * 5 // 4 + (4 << 20), 16 << 20), 64 << 20))


def mlp_kernel(x_ref, w1_ref, b1_ref, w2_ref, b2_ref, w3_ref, b3_ref, o_ref,
               *, approx_sigmoid):
    # Everything resident in VMEM: 3 MXU matmuls (f32 accumulation) + ReLU on the VPU
    # + exp / reciprocal on the EUP.
    wdt = w1_ref.dtype
    x = x_ref[...]                                               # already cast to wdt in the wrapper
    h1 = jnp.dot(x, w1_ref[...], preferred_element_type=jnp.float32) + b1_ref[...]
    h1 = jnp.maximum(h1, 0.0)                                    # ReLU
    h2 = jnp.dot(h1.astype(wdt), w2_ref[...],
                 preferred_element_type=jnp.float32) + b2_ref[...]
    h2 = jnp.maximum(h2, 0.0)                                    # ReLU
    z = jnp.dot(h2.astype(wdt), w3_ref[...],
                preferred_element_type=jnp.float32) + b3_ref[...]
    if approx_sigmoid:
        # Clamp so exp(-z) never reaches inf before the approx reciprocal
        # (sigmoid(-30) ~ 9e-14, so the clamp is numerically invisible).
        zc = jnp.maximum(z, -30.0)
        o_ref[...] = pl.reciprocal(1.0 + jnp.exp(-zc), approx=True)   # EUP vrcp, ~free
    else:
        o_ref[...] = 1.0 / (1.0 + jnp.exp(-z))                   # exact sigmoid


def prepare_params(params, *, use_bf16=True):
    """Pad + cast the weights ONCE (outside the hot path) into the kernel layout.

    params: dict with w1[in,300], b1[1,300], w2[300,300], b2[1,300],
            w3[300,out], b3[1,out]  (already stored as [in, out], i.e. PyTorch W.T).
    Padding rows/cols are exact zeros and flow through ReLU as zeros, so the sliced
    result is identical to the unpadded computation (for the f32 path).
    """
    w1, b1, w2, b2, w3, b3 = (params[k] for k in ("w1", "b1", "w2", "b2", "w3", "b3"))
    in_size, out_size = int(w1.shape[0]), int(w3.shape[1])
    in_pad = _round_up(in_size, LANE)              # lane-aligned K for the first matmul
    out_pad = _round_up(out_size, LANE)            # lane-dense output stores

    f32 = jnp.float32
    wdt = jnp.bfloat16 if use_bf16 else f32

    w1p = jnp.zeros((in_pad, HIDDEN_PAD), f32).at[:in_size, :HIDDEN].set(w1).astype(wdt)
    b1p = jnp.zeros((1, HIDDEN_PAD), f32).at[:, :HIDDEN].set(b1)
    w2p = jnp.zeros((HIDDEN_PAD, HIDDEN_PAD), f32).at[:HIDDEN, :HIDDEN].set(w2).astype(wdt)
    b2p = jnp.zeros((1, HIDDEN_PAD), f32).at[:, :HIDDEN].set(b2)
    w3p = jnp.zeros((HIDDEN_PAD, out_pad), f32).at[:HIDDEN, :out_size].set(w3).astype(wdt)
    b3p = jnp.zeros((1, out_pad), f32).at[:, :out_size].set(b3)

    return dict(w1=w1p, b1=b1p, w2=w2p, b2=b2p, w3=w3p, b3=b3p,
                in_size=in_size, out_size=out_size,
                in_pad=in_pad, out_pad=out_pad, dtype=wdt)


def neural_net_1_forward(x, prepped, *, batch_tile=512, approx_sigmoid=True,
                         single_buffer_weights=True):
    """Forward pass of NeuralNet_1 as a single Pallas TPU kernel.

    x: [B, in_size] float32
    prepped: output of prepare_params() (padded + cast once, reused per call).
    """
    B, in_size = x.shape
    assert in_size == prepped["in_size"], "x feature dim does not match prepared params"
    in_pad, out_pad = prepped["in_pad"], prepped["out_pad"]
    out_size, wdt = prepped["out_size"], prepped["dtype"]

    bt = _choose_batch_tile(B, batch_tile)
    B_pad = _round_up(B, bt)

    # Single fused pad+cast of x (batch -> B_pad, K -> in_pad). No-op when aligned.
    if (B_pad, in_pad) != (B, in_size):
        xp = jnp.zeros((B_pad, in_pad), wdt).at[:B, :in_size].set(x.astype(wdt))
    else:
        xp = x.astype(wdt)

    kernel = functools.partial(mlp_kernel, approx_sigmoid=approx_sigmoid)
    args = (xp, prepped["w1"], prepped["b1"], prepped["w2"], prepped["b2"],
            prepped["w3"], prepped["b3"])

    def build(single_buf):
        def wspec(shape):
            # Weights/biases have a constant index_map: they are fetched once, so
            # double-buffering them only wastes VMEM (matters most on v7x's 64 MiB).
            if single_buf:
                return pl.BlockSpec(shape, lambda i: (0, 0), pipeline_mode=pl.Buffered(1))
            return pl.BlockSpec(shape, lambda i: (0, 0))

        vmem = _vmem_limit_bytes(bt, in_pad, out_pad, jnp.dtype(wdt).itemsize,
                                 1 if single_buf else 2)
        return pl.pallas_call(
            kernel,
            out_shape=jax.ShapeDtypeStruct((B_pad, out_pad), jnp.float32),
            grid_spec=pltpu.PrefetchScalarGridSpec(
                num_scalar_prefetch=0,
                grid=(B_pad // bt,),
                in_specs=[
                    # x: tiled over the (padded) batch axis
                    pl.BlockSpec((bt, in_pad), lambda i: (i, 0)),
                    # weights / biases: full blocks, resident across all grid steps
                    wspec((in_pad, HIDDEN_PAD)),
                    wspec((1, HIDDEN_PAD)),
                    wspec((HIDDEN_PAD, HIDDEN_PAD)),
                    wspec((1, HIDDEN_PAD)),
                    wspec((HIDDEN_PAD, out_pad)),
                    wspec((1, out_pad)),
                ],
                out_specs=pl.BlockSpec((bt, out_pad), lambda i: (i, 0)),
            ),
            compiler_params=pltpu.CompilerParams(
                dimension_semantics=("parallel",),   # batch axis shards across TensorCores
                vmem_limit_bytes=vmem,
            ),
        )

    if single_buffer_weights:
        try:
            y_pad = build(True)(*args)
        except Exception:
            # Fallback: some jax versions reject pipeline_mode on pallas_call specs.
            y_pad = build(False)(*args)
    else:
        y_pad = build(False)(*args)

    return y_pad[:B, :out_size]


def init_params(key, in_size, out_size):
    """Deterministic init mimicking PyTorch nn.Linear default (U(-1/sqrt(fan_in), +))."""
    ks = jax.random.split(key, 6)

    def lin(kw, kb, fan_in, fan_out):
        bound = 1.0 / jnp.sqrt(jnp.float32(fan_in))
        # stored as [in, out] so the kernel does x @ W (== x @ W_pt.T)
        w = jax.random.uniform(kw, (fan_in, fan_out), jnp.float32, -bound, bound)
        b = jax.random.uniform(kb, (1, fan_out), jnp.float32, -bound, bound)
        return w, b

    w1, b1 = lin(ks[0], ks[1], in_size, HIDDEN)
    w2, b2 = lin(ks[2], ks[3], HIDDEN, HIDDEN)
    w3, b3 = lin(ks[4], ks[5], HIDDEN, out_size)
    return dict(w1=w1, b1=b1, w2=w2, b2=b2, w3=w3, b3=b3)


def reference_forward(x, p):
    h1 = jnp.maximum(x @ p["w1"] + p["b1"], 0.0)
    h2 = jnp.maximum(h1 @ p["w2"] + p["b2"], 0.0)
    return jax.nn.sigmoid(h2 @ p["w3"] + p["b3"])


if __name__ == "__main__":
    # TODO(synk): loss_fn / Adam optimizer / step() are training machinery, not part of
    # the forward pass, and are intentionally not translated.
    key = jax.random.PRNGKey(0)
    k_x, k_p = jax.random.split(key)

    B, in_size, out_size = 8, 32, 4
    x = jax.random.normal(k_x, (B, in_size), jnp.float32)
    params = init_params(k_p, in_size, out_size)
    y_ref = reference_forward(x, params)

    # Exact f32 path (validation): matches the PyTorch/f32 reference to tight tolerance.
    pp_f32 = prepare_params(params, use_bf16=False)
    y_exact = jax.block_until_ready(
        neural_net_1_forward(x, pp_f32, approx_sigmoid=False))

    # Fast default path: bf16 weights/activations (f32 accum) + EUP approx reciprocal.
    pp_bf16 = prepare_params(params, use_bf16=True)
    y_fast = jax.block_until_ready(neural_net_1_forward(x, pp_bf16))

    assert y_exact.shape == (B, out_size)
    assert y_fast.shape == (B, out_size)
    assert jnp.allclose(y_exact, y_ref, atol=1e-5, rtol=1e-5)
    assert jnp.allclose(y_fast, y_ref, atol=2e-2, rtol=2e-2)

    print("KERNEL_OK")
</pallas_src>

<mosaic_0001>
module attributes {stable_mosaic.version = 11 : i64} {
  func.func @mlp_kernel(%arg0: i32, %arg1: memref<8x128xf32, #tpu.memory_space<vmem>>, %arg2: memref<128x384xf32, #tpu.memory_space<vmem>>, %arg3: memref<1x384xf32, #tpu.memory_space<vmem>>, %arg4: memref<384x384xf32, #tpu.memory_space<vmem>>, %arg5: memref<1x384xf32, #tpu.memory_space<vmem>>, %arg6: memref<384x128xf32, #tpu.memory_space<vmem>>, %arg7: memref<1x128xf32, #tpu.memory_space<vmem>>, %arg8: memref<8x128xf32, #tpu.memory_space<vmem>>) attributes {dimension_semantics = [#tpu.dimension_semantics<parallel>], iteration_bounds = array<i64: 1>, scalar_prefetch = 0 : i64, scratch_operands = 0 : i64, tpu.core_type = #tpu.core_type<tc>, window_params = [{transform_indices = @transform_0, window_bounds = array<i64: 8, 128>}, {pipeline_mode = #tpu.pipeline_mode<synchronous>, transform_indices = @transform_1, window_bounds = array<i64: 128, 384>}, {pipeline_mode = #tpu.pipeline_mode<synchronous>, transform_indices = @transform_2, window_bounds = array<i64: 1, 384>}, {pipeline_mode = #tpu.pipeline_mode<synchronous>, transform_indices = @transform_3, window_bounds = array<i64: 384, 384>}, {pipeline_mode = #tpu.pipeline_mode<synchronous>, transform_indices = @transform_4, window_bounds = array<i64: 1, 384>}, {pipeline_mode = #tpu.pipeline_mode<synchronous>, transform_indices = @transform_5, window_bounds = array<i64: 384, 128>}, {pipeline_mode = #tpu.pipeline_mode<synchronous>, transform_indices = @transform_6, window_bounds = array<i64: 1, 128>}, {transform_indices = @transform_7, window_bounds = array<i64: 8, 128>}]} {
    %c0 = arith.constant 0 : index
    %c0_0 = arith.constant 0 : index
    %0 = vector.load %arg1[%c0, %c0_0] : memref<8x128xf32, #tpu.memory_space<vmem>>, vector<8x128xf32>
    %c0_1 = arith.constant 0 : index
    %c0_2 = arith.constant 0 : index
    %1 = vector.load %arg2[%c0_1, %c0_2] : memref<128x384xf32, #tpu.memory_space<vmem>>, vector<128x384xf32>
    %cst = arith.constant dense<0.000000e+00> : vector<8x384xf32>
    %2 = tpu.matmul %0, %1, %cst {dimension_numbers = #tpu.dot_dimension_numbers<[1], [0], [0], [1], [0, 0, 1, 1], [], []>} : vector<8x128xf32>, vector<128x384xf32>, vector<8x384xf32> -> vector<8x384xf32>
    %c0_3 = arith.constant 0 : index
    %c0_4 = arith.constant 0 : index
    %3 = vector.load %arg3[%c0_3, %c0_4] : memref<1x384xf32, #tpu.memory_space<vmem>>, vector<1x384xf32>
    %4 = vector.broadcast %3 : vector<1x384xf32> to vector<8x384xf32>
    %5 = arith.addf %2, %4 : vector<8x384xf32>
    %cst_5 = arith.constant 0.000000e+00 : f32
    %6 = vector.broadcast %cst_5 : f32 to vector<8x384xf32>
    %7 = arith.maximumf %5, %6 : vector<8x384xf32>
    %c0_6 = arith.constant 0 : index
    %c0_7 = arith.constant 0 : index
    %8 = vector.load %arg4[%c0_6, %c0_7] : memref<384x384xf32, #tpu.memory_space<vmem>>, vector<384x384xf32>
    %cst_8 = arith.constant dense<0.000000e+00> : vector<8x384xf32>
    %9 = tpu.matmul %7, %8, %cst_8 {dimension_numbers = #tpu.dot_dimension_numbers<[1], [0], [0], [1], [0, 0, 1, 1], [], []>} : vector<8x384xf32>, vector<384x384xf32>, vector<8x384xf32> -> vector<8x384xf32>
    %c0_9 = arith.constant 0 : index
    %c0_10 = arith.constant 0 : index
    %10 = vector.load %arg5[%c0_9, %c0_10] : memref<1x384xf32, #tpu.memory_space<vmem>>, vector<1x384xf32>
    %11 = vector.broadcast %10 : vector<1x384xf32> to vector<8x384xf32>
    %12 = arith.addf %9, %11 : vector<8x384xf32>
    %cst_11 = arith.constant 0.000000e+00 : f32
    %13 = vector.broadcast %cst_11 : f32 to vector<8x384xf32>
    %14 = arith.maximumf %12, %13 : vector<8x384xf32>
    %c0_12 = arith.constant 0 : index
    %c0_13 = arith.constant 0 : index
    %15 = vector.load %arg6[%c0_12, %c0_13] : memref<384x128xf32, #tpu.memory_space<vmem>>, vector<384x128xf32>
    %cst_14 = arith.constant dense<0.000000e+00> : vector<8x128xf32>
    %16 = tpu.matmul %14, %15, %cst_14 {dimension_numbers = #tpu.dot_dimension_numbers<[1], [0], [0], [1], [0, 0, 1, 1], [], []>} : vector<8x384xf32>, vector<384x128xf32>, vector<8x128xf32> -> vector<8x128xf32>
    %c0_15 = arith.constant 0 : index
    %c0_16 = arith.constant 0 : index
    %17 = vector.load %arg7[%c0_15, %c0_16] : memref<1x128xf32, #tpu.memory_space<vmem>>, vector<1x128xf32>
    %18 = vector.broadcast %17 : vector<1x128xf32> to vector<8x128xf32>
    %19 = arith.addf %16, %18 : vector<8x128xf32>
    %cst_17 = arith.constant 0.000000e+00 : f32
    %20 = vector.broadcast %cst_17 : f32 to vector<8x128xf32>
    %21 = arith.subf %20, %19 : vector<8x128xf32>
    %22 = math.exp %21 : vector<8x128xf32>
    %cst_18 = arith.constant 1.000000e+00 : f32
    %23 = vector.broadcast %cst_18 : f32 to vector<8x128xf32>
    %24 = arith.addf %23, %22 : vector<8x128xf32>
    %cst_19 = arith.constant 1.000000e+00 : f32
    %25 = vector.broadcast %cst_19 : f32 to vector<8x128xf32>
    %26 = arith.divf %25, %24 : vector<8x128xf32>
    %c0_20 = arith.constant 0 : index
    %c0_21 = arith.constant 0 : index
    %27 = vector.load %arg8[%c0_20, %c0_21] : memref<8x128xf32, #tpu.memory_space<vmem>>, vector<8x128xf32>
    tpu.vector_store %arg8[%c0_20, %c0_21], %26 {strides = array<i32>} : memref<8x128xf32, #tpu.memory_space<vmem>>, vector<8x128xf32>,
    return
  }
  func.func @transform_0(%arg0: i32) -> (i32, i32) {
    %c0_i32 = arith.constant 0 : i32
    %c0_i32_0 = arith.constant 0 : i32
    return %arg0, %c0_i32 : i32, i32
  }
  func.func @transform_1(%arg0: i32) -> (i32, i32) {
    %c0_i32 = arith.constant 0 : i32
    %c0_i32_0 = arith.constant 0 : i32
    %c0_i32_1 = arith.constant 0 : i32
    return %c0_i32, %c0_i32_0 : i32, i32
  }
  func.func @transform_2(%arg0: i32) -> (i32, i32) {
    %c0_i32 = arith.constant 0 : i32
    %c0_i32_0 = arith.constant 0 : i32
    %c0_i32_1 = arith.constant 0 : i32
    return %c0_i32, %c0_i32_0 : i32, i32
  }
  func.func @transform_3(%arg0: i32) -> (i32, i32) {
    %c0_i32 = arith.constant 0 : i32
    %c0_i32_0 = arith.constant 0 : i32
    %c0_i32_1 = arith.constant 0 : i32
    return %c0_i32, %c0_i32_0 : i32, i32
  }
  func.func @transform_4(%arg0: i32) -> (i32, i32) {
    %c0_i32 = arith.constant 0 : i32
    %c0_i32_0 = arith.constant 0 : i32
    %c0_i32_1 = arith.constant 0 : i32
    return %c0_i32, %c0_i32_0 : i32, i32
  }
  func.func @transform_5(%arg0: i32) -> (i32, i32) {
    %c0_i32 = arith.constant 0 : i32
    %c0_i32_0 = arith.constant 0 : i32
    %c0_i32_1 = arith.constant 0 : i32
    return %c0_i32, %c0_i32_0 : i32, i32
  }
  func.func @transform_6(%arg0: i32) -> (i32, i32) {
    %c0_i32 = arith.constant 0 : i32
    %c0_i32_0 = arith.constant 0 : i32
    %c0_i32_1 = arith.constant 0 : i32
    return %c0_i32, %c0_i32_0 : i32, i32
  }
  func.func @transform_7(%arg0: i32) -> (i32, i32) {
    %c0_i32 = arith.constant 0 : i32
    %c0_i32_0 = arith.constant 0 : i32
    return %arg0, %c0_i32 : i32, i32
  }
}

module attributes {stable_mosaic.version = 11 : i64} {
  func.func @mlp_kernel(%arg0: i32, %arg1: memref<8x128xf32, #tpu.memory_space<vmem>>, %arg2: memref<128x384xf32, #tpu.memory_space<vmem>>, %arg3: memref<1x384xf32, #tpu.memory_space<vmem>>, %arg4: memref<384x384xf32, #tpu.memory_space<vmem>>, %arg5: memref<1x384xf32, #tpu.memory_space<vmem>>, %arg6: memref<384x128xf32, #tpu.memory_space<vmem>>, %arg7: memref<1x128xf32, #tpu.memory_space<vmem>>, %arg8: memref<8x128xf32, #tpu.memory_space<vmem>>) attributes {dimension_semantics = [#tpu.dimension_semantics<parallel>], iteration_bounds = array<i64: 1>, scalar_prefetch = 0 : i64, scratch_operands = 0 : i64, tpu.core_type = #tpu.core_type<tc>, window_params = [{transform_indices = @transform_0, window_bounds = array<i64: 8, 128>}, {pipeline_mode = #tpu.pipeline_mode<synchronous>, transform_indices = @transform_1, window_bounds = array<i64: 128, 384>}, {pipeline_mode = #tpu.pipeline_mode<synchronous>, transform_indices = @transform_2, window_bounds = array<i64: 1, 384>}, {pipeline_mode = #tpu.pipeline_mode<synchronous>, transform_indices = @transform_3, window_bounds = array<i64: 384, 384>}, {pipeline_mode = #tpu.pipeline_mode<synchronous>, transform_indices = @transform_4, window_bounds = array<i64: 1, 384>}, {pipeline_mode = #tpu.pipeline_mode<synchronous>, transform_indices = @transform_5, window_bounds = array<i64: 384, 128>}, {pipeline_mode = #tpu.pipeline_mode<synchronous>, transform_indices = @transform_6, window_bounds = array<i64: 1, 128>}, {transform_indices = @transform_7, window_bounds = array<i64: 8, 128>}]} {
    %c0 = arith.constant 0 : index
    %c0_0 = arith.constant 0 : index
    %0 = vector.load %arg1[%c0, %c0_0] : memref<8x128xf32, #tpu.memory_space<vmem>>, vector<8x128xf32>
    %c0_1 = arith.constant 0 : index
    %c0_2 = arith.constant 0 : index
    %1 = vector.load %arg2[%c0_1, %c0_2] : memref<128x384xf32, #tpu.memory_space<vmem>>, vector<128x384xf32>
    %cst = arith.constant dense<0.000000e+00> : vector<8x384xf32>
    %2 = tpu.matmul %0, %1, %cst {dimension_numbers = #tpu.dot_dimension_numbers<[1], [0], [0], [1], [0, 0, 1, 1], [], []>} : vector<8x128xf32>, vector<128x384xf32>, vector<8x384xf32> -> vector<8x384xf32>
    %c0_3 = arith.constant 0 : index
    %c0_4 = arith.constant 0 : index
    %3 = vector.load %arg3[%c0_3, %c0_4] : memref<1x384xf32, #tpu.memory_space<vmem>>, vector<1x384xf32>
    %4 = vector.broadcast %3 : vector<1x384xf32> to vector<8x384xf32>
    %5 = arith.addf %2, %4 : vector<8x384xf32>
    %cst_5 = arith.constant 0.000000e+00 : f32
    %6 = vector.broadcast %cst_5 : f32 to vector<8x384xf32>
    %7 = arith.maximumf %5, %6 : vector<8x384xf32>
    %c0_6 = arith.constant 0 : index
    %c0_7 = arith.constant 0 : index
    %8 = vector.load %arg4[%c0_6, %c0_7] : memref<384x384xf32, #tpu.memory_space<vmem>>, vector<384x384xf32>
    %cst_8 = arith.constant dense<0.000000e+00> : vector<8x384xf32>
    %9 = tpu.matmul %7, %8, %cst_8 {dimension_numbers = #tpu.dot_dimension_numbers<[1], [0], [0], [1], [0, 0, 1, 1], [], []>} : vector<8x384xf32>, vector<384x384xf32>, vector<8x384xf32> -> vector<8x384xf32>
    %c0_9 = arith.constant 0 : index
    %c0_10 = arith.constant 0 : index
    %10 = vector.load %arg5[%c0_9, %c0_10] : memref<1x384xf32, #tpu.memory_space<vmem>>, vector<1x384xf32>
    %11 = vector.broadcast %10 : vector<1x384xf32> to vector<8x384xf32>
    %12 = arith.addf %9, %11 : vector<8x384xf32>
    %cst_11 = arith.constant 0.000000e+00 : f32
    %13 = vector.broadcast %cst_11 : f32 to vector<8x384xf32>
    %14 = arith.maximumf %12, %13 : vector<8x384xf32>
    %c0_12 = arith.constant 0 : index
    %c0_13 = arith.constant 0 : index
    %15 = vector.load %arg6[%c0_12, %c0_13] : memref<384x128xf32, #tpu.memory_space<vmem>>, vector<384x128xf32>
    %cst_14 = arith.constant dense<0.000000e+00> : vector<8x128xf32>
    %16 = tpu.matmul %14, %15, %cst_14 {dimension_numbers = #tpu.dot_dimension_numbers<[1], [0], [0], [1], [0, 0, 1, 1], [], []>} : vector<8x384xf32>, vector<384x128xf32>, vector<8x128xf32> -> vector<8x128xf32>
    %c0_15 = arith.constant 0 : index
    %c0_16 = arith.constant 0 : index
    %17 = vector.load %arg7[%c0_15, %c0_16] : memref<1x128xf32, #tpu.memory_space<vmem>>, vector<1x128xf32>
    %18 = vector.broadcast %17 : vector<1x128xf32> to vector<8x128xf32>
    %19 = arith.addf %16, %18 : vector<8x128xf32>
    %cst_17 = arith.constant 0.000000e+00 : f32
    %20 = vector.broadcast %cst_17 : f32 to vector<8x128xf32>
    %21 = arith.subf %20, %19 : vector<8x128xf32>
    %22 = math.exp %21 : vector<8x128xf32>
    %cst_18 = arith.constant 1.000000e+00 : f32
    %23 = vector.broadcast %cst_18 : f32 to vector<8x128xf32>
    %24 = arith.addf %23, %22 : vector<8x128xf32>
    %cst_19 = arith.constant 1.000000e+00 : f32
    %25 = vector.broadcast %cst_19 : f32 to vector<8x128xf32>
    %26 = arith.divf %25, %24 : vector<8x128xf32>
    %c0_20 = arith.constant 0 : index
    %c0_21 = arith.constant 0 : index
    %27 = vector.load %arg8[%c0_20, %c0_21] : memref<8x128xf32, #tpu.memory_space<vmem>>, vector<8x128xf32>
    tpu.vector_store %arg8[%c0_20, %c0_21], %26 {strides = array<i32>} : memref<8x128xf32, #tpu.memory_space<vmem>>, vector<8x128xf32>,
    return
  }
  func.func @transform_0(%arg0: i32) -> (i32, i32) {
    %c0_i32 = arith.constant 0 : i32
    %c0_i32_0 = arith.constant 0 : i32
    return %arg0, %c0_i32 : i32, i32
  }
  func.func @transform_1(%arg0: i32) -> (i32, i32) {
    %c0_i32 = arith.constant 0 : i32
    %c0_i32_0 = arith.constant 0 : i32
    %c0_i32_1 = arith.constant 0 : i32
    return %c0_i32, %c0_i32_0 : i32, i32
  }
  func.func @transform_2(%arg0: i32) -> (i32, i32) {
    %c0_i32 = arith.constant 0 : i32
    %c0_i32_0 = arith.constant 0 : i32
    %c0_i32_1 = arith.constant 0 : i32
    return %c0_i32, %c0_i32_0 : i32, i32
  }
  func.func @transform_3(%arg0: i32) -> (i32, i32) {
    %c0_i32 = arith.constant 0 : i32
    %c0_i32_0 = arith.constant 0 : i32
    %c0_i32_1 = arith.constant 0 : i32
    return %c0_i32, %c0_i32_0 : i32, i32
  }
  func.func @transform_4(%arg0: i32) -> (i32, i32) {
    %c0_i32 = arith.constant 0 : i32
    %c0_i32_0 = arith.constant 0 : i32
    %c0_i32_1 = arith.constant 0 : i32
    return %c0_i32, %c0_i32_0 : i32, i32
  }
  func.func @transform_5(%arg0: i32) -> (i32, i32) {
    %c0_i32 = arith.constant 0 : i32
    %c0_i32_0 = arith.constant 0 : i32
    %c0_i32_1 = arith.constant 0 : i32
    return %c0_i32, %c0_i32_0 : i32, i32
  }
  func.func @transform_6(%arg0: i32) -> (i32, i32) {
    %c0_i32 = arith.constant 0 : i32
    %c0_i32_0 = arith.constant 0 : i32
    %c0_i32_1 = arith.constant 0 : i32
    return %c0_i32, %c0_i32_0 : i32, i32
  }
  func.func @transform_7(%arg0: i32) -> (i32, i32) {
    %c0_i32 = arith.constant 0 : i32
    %c0_i32_0 = arith.constant 0 : i32
    return %arg0, %c0_i32 : i32, i32
  }
}

</mosaic_0001>

<llo_original>
// kernel: tpu_custom_call.1
$region0: #{tpu_custom_call.1}
  #allocation0 [shape = 'u32[]', space=smem, size = 0x4, offset = 0x4, fixed_abs, tag = 'smem constant byte address 0x4 - core index']
  #allocation1 [shape = 'u32[72,128]{1,0:T(1,128)}', space=vmem, size = 0x9000, scoped, tag = 'internal scratch']
  %s0 = inlined_call_operand.hbm [shape: f32[8,128], index: 0, kind: input, shape index: {}]
  %s1 = inlined_call_operand.hbm [shape: f32[128,384], index: 1, kind: input, shape index: {}]
  %s2 = inlined_call_operand.hbm [shape: f32[1,384], index: 2, kind: input, shape index: {}]
  %s3 = inlined_call_operand.hbm [shape: f32[384,384], index: 3, kind: input, shape index: {}]
  %s4 = inlined_call_operand.vmem [shape: f32[1,384], index: 4, kind: input, shape index: {}]
  %s5 = inlined_call_operand.hbm [shape: f32[384,128], index: 5, kind: input, shape index: {}]
  %s6 = inlined_call_operand.vmem [shape: f32[1,128], index: 6, kind: input, shape index: {}]
  %s7 = inlined_call_operand.hbm [shape: f32[8,128], index: 7, kind: output, shape index: {}]
  %s8 = sld [smem:[#allocation0]]
  $region58: #{tpu_custom_call.1} parent=0
    _
  %s10 = ssub.s32 1, %s8
  %s11 = scalar_select 0, %s10, %s8
  $region1: #{tpu_custom_call.1} parent=0
    #allocation2 [shape = 'u8[4096]{0}', space=vmem, size = 0x1000, scoped, tag = 'input window, operand 0, single buffered']
    #allocation3 [shape = 's32[1]{0}', space=sflag, size = 0x4, scoped, tag = 'scoped memory for tpu_custom_call.1']
    #allocation4 [shape = 's32[1]{0}', space=sflag, size = 0x4, scoped, tag = 'scoped memory for tpu_custom_call.1']
    #allocation5 [shape = 'u8[196608]{0}', space=vmem, size = 0x30000, scoped, tag = 'input window, operand 1, single buffered']
    #allocation6 [shape = 's32[1]{0}', space=sflag, size = 0x4, scoped, tag = 'scoped memory for tpu_custom_call.1']
    #allocation7 [shape = 'u8[1536]{0}', space=vmem, size = 0x800, scoped, tag = 'input window, operand 2, single buffered']
    #allocation8 [shape = 'u8[589824]{0}', space=vmem, size = 0x90000, scoped, tag = 'input window, operand 3, single buffered']
    #allocation9 [shape = 's32[1]{0}', space=sflag, size = 0x4, scoped, tag = 'scoped memory for tpu_custom_call.1']
    #allocation10 [shape = 'u8[196608]{0}', space=vmem, size = 0x30000, scoped, tag = 'input window, operand 5, single buffered']
    #allocation11 [shape = 'u8[4096]{0}', space=vmem, size = 0x1000, scoped, tag = 'output window, operand 0, single buffered']
    %12 = vsyncpa [#allocation3], 0
    %13 = vsyncpa [#allocation6], 0
    %14 = vsyncpa [#allocation9], 0
    %15 = vsyncpa [#allocation4], 0
    // Predicated region
    $region2: #{tpu_custom_call.1} parent=1 // pred_check
      _
    $region3: #{tpu_custom_call.1} parent=1 // pred_check_branch
      %17 = sbr.rel (0) target = $region5
    $region4: #{tpu_custom_call.1} parent=1 // pred_region
      %19 = vsyncadd [#allocation3], 0
      %s21 = sshll.u32 %s0, 4
      %s22 = int_to_ptr.hbm [resolvable:$true] %s21
      %s23 = sshll.u32 [#allocation2], 4
      %s24 = int_to_ptr.vmem [resolvable:$true] %s23
      %26 = dma.hbm_to_vmem [thread:$0]  %s22, 128, %s24, [#allocation3]
    $region5: #{tpu_custom_call.1} parent=1 // pred_fallthru
      _
    // Predicated region
    $region6: #{tpu_custom_call.1} parent=1 // pred_check
      _
    $region7: #{tpu_custom_call.1} parent=1 // pred_check_branch
      %28 = sbr.rel (0) target = $region9
    $region8: #{tpu_custom_call.1} parent=1 // pred_region
      %30 = vsyncadd [#allocation6], 0
      %s31 = sshll.u32 %s1, 4
      %s32 = int_to_ptr.hbm [resolvable:$true] %s31
      %s33 = sshll.u32 [#allocation5], 4
      %s34 = int_to_ptr.vmem [resolvable:$true] %s33
      %39 = dma.hbm_to_vmem [thread:$0]  %s32, 6144, %s34, [#allocation6], 384, 384, 24
    $region9: #{tpu_custom_call.1} parent=1 // pred_fallthru
      _
    // Predicated region
    $region10: #{tpu_custom_call.1} parent=1 // pred_check
      _
    $region11: #{tpu_custom_call.1} parent=1 // pred_check_branch
      %41 = sbr.rel (0) target = $region13
    $region12: #{tpu_custom_call.1} parent=1 // pred_region
      %43 = vsyncadd [#allocation6], 0
      %s45 = sshll.u32 %s2, 4
      %s46 = int_to_ptr.hbm [resolvable:$true] %s45
      %s47 = sshll.u32 [#allocation7], 4
      %s48 = int_to_ptr.vmem [resolvable:$true] %s47
      %50 = dma.hbm_to_vmem [thread:$0]  %s46, 48, %s48, [#allocation6]
    $region13: #{tpu_custom_call.1} parent=1 // pred_fallthru
      _
    // Predicated region
    $region14: #{tpu_custom_call.1} parent=1 // pred_check
      _
    $region15: #{tpu_custom_call.1} parent=1 // pred_check_branch
      %52 = sbr.rel (0) target = $region17
    $region16: #{tpu_custom_call.1} parent=1 // pred_region
      %54 = vsyncadd [#allocation9], 0
      %s55 = sshll.u32 %s3, 4
      %s56 = int_to_ptr.hbm [resolvable:$true] %s55
      %s57 = sshll.u32 [#allocation8], 4
      %s58 = int_to_ptr.vmem [resolvable:$true] %s57
      %63 = dma.hbm_to_vmem [thread:$0]  %s56, 18432, %s58, [#allocation9], 384, 384, 24
    $region17: #{tpu_custom_call.1} parent=1 // pred_fallthru
      _
    // Predicated region
    $region18: #{tpu_custom_call.1} parent=1 // pred_check
      _
    $region19: #{tpu_custom_call.1} parent=1 // pred_check_branch
      %65 = sbr.rel (0) target = $region21
    $region20: #{tpu_custom_call.1} parent=1 // pred_region
      _
    $region21: #{tpu_custom_call.1} parent=1 // pred_fallthru
      _
    // Predicated region
    $region22: #{tpu_custom_call.1} parent=1 // pred_check
      _
    $region23: #{tpu_custom_call.1} parent=1 // pred_check_branch
      %67 = sbr.rel (0) target = $region25
    $region24: #{tpu_custom_call.1} parent=1 // pred_region
      %69 = vsyncadd [#allocation9], 0
      %s70 = sshll.u32 %s5, 4
      %s71 = int_to_ptr.hbm [resolvable:$true] %s70
      %s72 = sshll.u32 [#allocation10], 4
      %s73 = int_to_ptr.vmem [resolvable:$true] %s72
      %78 = dma.hbm_to_vmem [thread:$0]  %s71, 6144, %s73, [#allocation9], 128, 128, 8
    $region25: #{tpu_custom_call.1} parent=1 // pred_fallthru
      _
    // Predicated region
    $region26: #{tpu_custom_call.1} parent=1 // pred_check
      _
    $region27: #{tpu_custom_call.1} parent=1 // pred_check_branch
      %80 = sbr.rel (0) target = $region29
    $region28: #{tpu_custom_call.1} parent=1 // pred_region
      _
    $region29: #{tpu_custom_call.1} parent=1 // pred_fallthru
      _
    // Predicated region
    $region30: #{tpu_custom_call.1} parent=1 // pred_check
      _
    $region31: #{tpu_custom_call.1} parent=1 // pred_check_branch
      %82 = sbr.rel (0) target = $region33
    $region32: #{tpu_custom_call.1} parent=1 // pred_region
      %84 = dma.done [#allocation3], 128
    $region33: #{tpu_custom_call.1} parent=1 // pred_fallthru
      _
    // Predicated region
    $region34: #{tpu_custom_call.1} parent=1 // pred_check
      _
    $region35: #{tpu_custom_call.1} parent=1 // pred_check_branch
      %86 = sbr.rel (0) target = $region37
    $region36: #{tpu_custom_call.1} parent=1 // pred_region
      %88 = dma.done [#allocation6], 6144
    $region37: #{tpu_custom_call.1} parent=1 // pred_fallthru
      _
    // Predicated region
    $region38: #{tpu_custom_call.1} parent=1 // pred_check
      _
    $region39: #{tpu_custom_call.1} parent=1 // pred_check_branch
      %90 = sbr.rel (0) target = $region41
    $region40: #{tpu_custom_call.1} parent=1 // pred_region
      %92 = dma.done [#allocation6], 48
    $region41: #{tpu_custom_call.1} parent=1 // pred_fallthru
      _
    // Predicated region
    $region42: #{tpu_custom_call.1} parent=1 // pred_check
      _
    $region43: #{tpu_custom_call.1} parent=1 // pred_check_branch
      %94 = sbr.rel (0) target = $region45
    $region44: #{tpu_custom_call.1} parent=1 // pred_region
      %96 = dma.done [#allocation9], 18432
    $region45: #{tpu_custom_call.1} parent=1 // pred_fallthru
      _
    // Predicated region
    $region46: #{tpu_custom_call.1} parent=1 // pred_check
      _
    $region47: #{tpu_custom_call.1} parent=1 // pred_check_branch
      %98 = sbr.rel (0) target = $region49
    $region48: #{tpu_custom_call.1} parent=1 // pred_region
      %100 = dma.done [#allocation9], 6144
    $region49: #{tpu_custom_call.1} parent=1 // pred_fallthru
      _
    %v101 = vld [vmem:[#allocation2] sm:$0xff]
    %v102 = vld [vmem:[#allocation5] sm:$0xff]
    %v103 = vld [vmem:[#allocation5 + $0x8] sm:$0xff]
    %v104 = vld [vmem:[#allocation5 + $0x10] sm:$0xff]
    %v105 = vld [vmem:[#allocation5 + $0x18] sm:$0xff]
    %v106 = vld [vmem:[#allocation5 + $0x20] sm:$0xff]
    %v107 = vld [vmem:[#allocation5 + $0x28] sm:$0xff]
    %v108 = vld [vmem:[#allocation5 + $0x30] sm:$0xff]
    %v109 = vld [vmem:[#allocation5 + $0x38] sm:$0xff]
    %v110 = vld [vmem:[#allocation5 + $0x40] sm:$0xff]
    %v111 = vld [vmem:[#allocation5 + $0x48] sm:$0xff]
    %v112 = vld [vmem:[#allocation5 + $0x50] sm:$0xff]
    %v113 = vld [vmem:[#allocation5 + $0x58] sm:$0xff]
    %v114 = vld [vmem:[#allocation5 + $0x60] sm:$0xff]
    %v115 = vld [vmem:[#allocation5 + $0x68] sm:$0xff]
    %v116 = vld [vmem:[#allocation5 + $0x70] sm:$0xff]
    %v117 = vld [vmem:[#allocation5 + $0x78] sm:$0xff]
    %v118 = vld [vmem:[#allocation5 + $0x80] sm:$0xff]
    %v119 = vld [vmem:[#allocation5 + $0x88] sm:$0xff]
    %v120 = vld [vmem:[#allocation5 + $0x90] sm:$0xff]
    %v121 = vld [vmem:[#allocation5 + $0x98] sm:$0xff]
    %v122 = vld [vmem:[#allocation5 + $0xa0] sm:$0xff]
    %v123 = vld [vmem:[#allocation5 + $0xa8] sm:$0xff]
    %v124 = vld [vmem:[#allocation5 + $0xb0] sm:$0xff]
    %v125 = vld [vmem:[#allocation5 + $0xb8] sm:$0xff]
    %v126 = vld [vmem:[#allocation5 + $0xc0] sm:$0xff]
    %v127 = vld [vmem:[#allocation5 + $0xc8] sm:$0xff]
    %v128 = vld [vmem:[#allocation5 + $0xd0] sm:$0xff]
    %v129 = vld [vmem:[#allocation5 + $0xd8] sm:$0xff]
    %v130 = vld [vmem:[#allocation5 + $0xe0] sm:$0xff]
    %v131 = vld [vmem:[#allocation5 + $0xe8] sm:$0xff]
    %v132 = vld [vmem:[#allocation5 + $0xf0] sm:$0xff]
    %v133 = vld [vmem:[#allocation5 + $0xf8] sm:$0xff]
    %v134 = vld [vmem:[#allocation5 + $0x100] sm:$0xff]
    %v135 = vld [vmem:[#allocation5 + $0x108] sm:$0xff]
    %v136 = vld [vmem:[#allocation5 + $0x110] sm:$0xff]
    %v137 = vld [vmem:[#allocation5 + $0x118] sm:$0xff]
    %v138 = vld [vmem:[#allocation5 + $0x120] sm:$0xff]
    %v139 = vld [vmem:[#allocation5 + $0x128] sm:$0xff]
    %v140 = vld [vmem:[#allocation5 + $0x130] sm:$0xff]
    %v141 = vld [vmem:[#allocation5 + $0x138] sm:$0xff]
    %v142 = vld [vmem:[#allocation5 + $0x140] sm:$0xff]
    %v143 = vld [vmem:[#allocation5 + $0x148] sm:$0xff]
    %v144 = vld [vmem:[#allocation5 + $0x150] sm:$0xff]
    %v145 = vld [vmem:[#allocation5 + $0x158] sm:$0xff]
    %v146 = vld [vmem:[#allocation5 + $0x160] sm:$0xff]
    %v147 = vld [vmem:[#allocation5 + $0x168] sm:$0xff]
    %v148 = vld [vmem:[#allocation5 + $0x170] sm:$0xff]
    %v149 = vld [vmem:[#allocation5 + $0x178] sm:$0xff]
    %v150 = vld [vmem:[#allocation7] sm:$0x7]
    %v152 = vperm.slane %v150, 0
    %v153 = vperm.slane %v150, 1
    %v154 = vperm.slane %v150, 2
    %158 = vmatpush.msra.mxu0 %v147
    %159 = vmatpush.msra.mxu0 %v144
    %160 = vmatpush.msra.mxu0 %v141
    %161 = vmatpush.msra.mxu0 %v138
    %162 = vmatpush.msra.mxu0 %v135
    %163 = vmatpush.msra.mxu0 %v132
    %164 = vmatpush.msra.mxu0 %v129
    %165 = vmatpush.msra.mxu0 %v126
    %166 = vmatpush.msra.mxu0 %v123
    %167 = vmatpush.msra.mxu0 %v120
    %168 = vmatpush.msra.mxu0 %v117
    %169 = vmatpush.msra.mxu0 %v114
    %170 = vmatpush.msra.mxu0 %v111
    %171 = vmatpush.msra.mxu0 %v108
    %172 = vmatpush.msra.mxu0 %v105
    %173 = vmatpush.msra.mxu0 %v102
    %174 = vmatmul.f32.gmra.mxu0 %v101
    %v175 = vpop.f32.mrf.mxu0
    %v176 = vadd.f32 %v152, %v175
    %177 = vdwg.mxu0
    %178 = vmatpush.msra.mxu0 %v148
    %179 = vmatpush.msra.mxu0 %v145
    %180 = vmatpush.msra.mxu0 %v142
    %181 = vmatpush.msra.mxu0 %v139
    %182 = vmatpush.msra.mxu0 %v136
    %183 = vmatpush.msra.mxu0 %v133
    %184 = vmatpush.msra.mxu0 %v130
    %185 = vmatpush.msra.mxu0 %v127
    %186 = vmatpush.msra.mxu0 %v124
    %187 = vmatpush.msra.mxu0 %v121
    %188 = vmatpush.msra.mxu0 %v118
    %189 = vmatpush.msra.mxu0 %v115
    %190 = vmatpush.msra.mxu0 %v112
    %191 = vmatpush.msra.mxu0 %v109
    %192 = vmatpush.msra.mxu0 %v106
    %193 = vmatpush.msra.mxu0 %v103
    %194 = vmatmul.f32.gmra.mxu0 %v101
    %v195 = vpop.f32.mrf.mxu0
    %v196 = vadd.f32 %v153, %v195
    %197 = vdwg.mxu0
    %198 = vmatpush.msra.mxu0 %v149
    %199 = vmatpush.msra.mxu0 %v146
    %200 = vmatpush.msra.mxu0 %v143
    %201 = vmatpush.msra.mxu0 %v140
    %202 = vmatpush.msra.mxu0 %v137
    %203 = vmatpush.msra.mxu0 %v134
    %204 = vmatpush.msra.mxu0 %v131
    %205 = vmatpush.msra.mxu0 %v128
    %206 = vmatpush.msra.mxu0 %v125
    %207 = vmatpush.msra.mxu0 %v122
    %208 = vmatpush.msra.mxu0 %v119
    %209 = vmatpush.msra.mxu0 %v116
    %210 = vmatpush.msra.mxu0 %v113
    %211 = vmatpush.msra.mxu0 %v110
    %212 = vmatpush.msra.mxu0 %v107
    %213 = vmatpush.msra.mxu0 %v104
    %214 = vmatmul.f32.gmra.mxu0 %v101
    %v215 = vpop.f32.mrf.mxu0
    %v216 = vadd.f32 %v154, %v215
    %217 = vdwg.mxu0
    %v218 = vmax.f32 %v176, 0.0
    %v219 = vmax.f32 %v196, 0.0
    %v220 = vmax.f32 %v216, 0.0
    %v221 = vld [vmem:[#allocation8] sm:$0xff]
    %v222 = vld [vmem:[#allocation8 + $0x8] sm:$0xff]
    %v223 = vld [vmem:[#allocation8 + $0x10] sm:$0xff]
    %v224 = vld [vmem:[#allocation8 + $0x18] sm:$0xff]
    %v225 = vld [vmem:[#allocation8 + $0x20] sm:$0xff]
    %v226 = vld [vmem:[#allocation8 + $0x28] sm:$0xff]
    %v227 = vld [vmem:[#allocation8 + $0x30] sm:$0xff]
    %v228 = vld [vmem:[#allocation8 + $0x38] sm:$0xff]
    %v229 = vld [vmem:[#allocation8 + $0x40] sm:$0xff]
    %v230 = vld [vmem:[#allocation8 + $0x48] sm:$0xff]
    %v231 = vld [vmem:[#allocation8 + $0x50] sm:$0xff]
    %v232 = vld [vmem:[#allocation8 + $0x58] sm:$0xff]
    %v233 = vld [vmem:[#allocation8 + $0x60] sm:$0xff]
    %v234 = vld [vmem:[#allocation8 + $0x68] sm:$0xff]
    %v235 = vld [vmem:[#allocation8 + $0x70] sm:$0xff]
    %v236 = vld [vmem:[#allocation8 + $0x78] sm:$0xff]
    %v237 = vld [vmem:[#allocation8 + $0x80] sm:$0xff]
    %v238 = vld [vmem:[#allocation8 + $0x88] sm:$0xff]
    %v239 = vld [vmem:[#allocation8 + $0x90] sm:$0xff]
    %v240 = vld [vmem:[#allocation8 + $0x98] sm:$0xff]
    %v241 = vld [vmem:[#allocation8 + $0xa0] sm:$0xff]
    %v242 = vld [vmem:[#allocation8 + $0xa8] sm:$0xff]
    %v243 = vld [vmem:[#allocation8 + $0xb0] sm:$0xff]
    %v244 = vld [vmem:[#allocation8 + $0xb8] sm:$0xff]
    %v245 = vld [vmem:[#allocation8 + $0xc0] sm:$0xff]
    %v246 = vld [vmem:[#allocation8 + $0xc8] sm:$0xff]
    %v247 = vld [vmem:[#allocation8 + $0xd0] sm:$0xff]
    %v248 = vld [vmem:[#allocation8 + $0xd8] sm:$0xff]
    %v249 = vld [vmem:[#allocation8 + $0xe0] sm:$0xff]
    %v250 = vld [vmem:[#allocation8 + $0xe8] sm:$0xff]
    %v251 = vld [vmem:[#allocation8 + $0xf0] sm:$0xff]
    %v252 = vld [vmem:[#allocation8 + $0xf8] sm:$0xff]
    %v253 = vld [vmem:[#allocation8 + $0x100] sm:$0xff]
    %v254 = vld [vmem:[#allocation8 + $0x108] sm:$0xff]
    %v255 = vld [vmem:[#allocation8 + $0x110] sm:$0xff]
    %v256 = vld [vmem:[#allocation8 + $0x118] sm:$0xff]
    %v257 = vld [vmem:[#allocation8 + $0x120] sm:$0xff]
    %v258 = vld [vmem:[#allocation8 + $0x128] sm:$0xff]
    %v259 = vld [vmem:[#allocation8 + $0x130] sm:$0xff]
    %v260 = vld [vmem:[#allocation8 + $0x138] sm:$0xff]
    %v261 = vld [vmem:[#allocation8 + $0x140] sm:$0xff]
    %v262 = vld [vmem:[#allocation8 + $0x148] sm:$0xff]
    %v263 = vld [vmem:[#allocation8 + $0x150] sm:$0xff]
    %v264 = vld [vmem:[#allocation8 + $0x158] sm:$0xff]
    %v265 = vld [vmem:[#allocation8 + $0x160] sm:$0xff]
    %v266 = vld [vmem:[#allocation8 + $0x168] sm:$0xff]
    %v267 = vld [vmem:[#allocation8 + $0x170] sm:$0xff]
    %v268 = vld [vmem:[#allocation8 + $0x178] sm:$0xff]
    %v269 = vld [vmem:[#allocation8 + $0x180] sm:$0xff]
    %v270 = vld [vmem:[#allocation8 + $0x188] sm:$0xff]
    %v271 = vld [vmem:[#allocation8 + $0x190] sm:$0xff]
    %v272 = vld [vmem:[#allocation8 + $0x198] sm:$0xff]
    %v273 = vld [vmem:[#allocation8 + $0x1a0] sm:$0xff]
    %v274 = vld [vmem:[#allocation8 + $0x1a8] sm:$0xff]
    %v275 = vld [vmem:[#allocation8 + $0x1b0] sm:$0xff]
    %v276 = vld [vmem:[#allocation8 + $0x1b8] sm:$0xff]
    %v277 = vld [vmem:[#allocation8 + $0x1c0] sm:$0xff]
    %v278 = vld [vmem:[#allocation8 + $0x1c8] sm:$0xff]
    %v279 = vld [vmem:[#allocation8 + $0x1d0] sm:$0xff]
    %v280 = vld [vmem:[#allocation8 + $0x1d8] sm:$0xff]
    %v281 = vld [vmem:[#allocation8 + $0x1e0] sm:$0xff]
    %v282 = vld [vmem:[#allocation8 + $0x1e8] sm:$0xff]
    %v283 = vld [vmem:[#allocation8 + $0x1f0] sm:$0xff]
    %v284 = vld [vmem:[#allocation8 + $0x1f8] sm:$0xff]
    %v285 = vld [vmem:[#allocation8 + $0x200] sm:$0xff]
    %v286 = vld [vmem:[#allocation8 + $0x208] sm:$0xff]
    %v287 = vld [vmem:[#allocation8 + $0x210] sm:$0xff]
    %v288 = vld [vmem:[#allocation8 + $0x218] sm:$0xff]
    %v289 = vld [vmem:[#allocation8 + $0x220] sm:$0xff]
    %v290 = vld [vmem:[#allocation8 + $0x228] sm:$0xff]
    %v291 = vld [vmem:[#allocation8 + $0x230] sm:$0xff]
    %v292 = vld [vmem:[#allocation8 + $0x238] sm:$0xff]
    %v293 = vld [vmem:[#allocation8 + $0x240] sm:$0xff]
    %v294 = vld [vmem:[#allocation8 + $0x248] sm:$0xff]
    %v295 = vld [vmem:[#allocation8 + $0x250] sm:$0xff]
    %v296 = vld [vmem:[#allocation8 + $0x258] sm:$0xff]
    %v297 = vld [vmem:[#allocation8 + $0x260] sm:$0xff]
    %v298 = vld [vmem:[#allocation8 + $0x268] sm:$0xff]
    %v299 = vld [vmem:[#allocation8 + $0x270] sm:$0xff]
    %v300 = vld [vmem:[#allocation8 + $0x278] sm:$0xff]
    %v301 = vld [vmem:[#allocation8 + $0x280] sm:$0xff]
    %v302 = vld [vmem:[#allocation8 + $0x288] sm:$0xff]
    %v303 = vld [vmem:[#allocation8 + $0x290] sm:$0xff]
    %v304 = vld [vmem:[#allocation8 + $0x298] sm:$0xff]
    %v305 = vld [vmem:[#allocation8 + $0x2a0] sm:$0xff]
    %v306 = vld [vmem:[#allocation8 + $0x2a8] sm:$0xff]
    %v307 = vld [vmem:[#allocation8 + $0x2b0] sm:$0xff]
    %v308 = vld [vmem:[#allocation8 + $0x2b8] sm:$0xff]
    %v309 = vld [vmem:[#allocation8 + $0x2c0] sm:$0xff]
    %v310 = vld [vmem:[#allocation8 + $0x2c8] sm:$0xff]
    %v311 = vld [vmem:[#allocation8 + $0x2d0] sm:$0xff]
    %v312 = vld [vmem:[#allocation8 + $0x2d8] sm:$0xff]
    %v313 = vld [vmem:[#allocation8 + $0x2e0] sm:$0xff]
    %v314 = vld [vmem:[#allocation8 + $0x2e8] sm:$0xff]
    %v315 = vld [vmem:[#allocation8 + $0x2f0] sm:$0xff]
    %v316 = vld [vmem:[#allocation8 + $0x2f8] sm:$0xff]
    %v317 = vld [vmem:[#allocation8 + $0x300] sm:$0xff]
    %v318 = vld [vmem:[#allocation8 + $0x308] sm:$0xff]
    %v319 = vld [vmem:[#allocation8 + $0x310] sm:$0xff]
    %v320 = vld [vmem:[#allocation8 + $0x318] sm:$0xff]
    %v321 = vld [vmem:[#allocation8 + $0x320] sm:$0xff]
    %v322 = vld [vmem:[#allocation8 + $0x328] sm:$0xff]
    %v323 = vld [vmem:[#allocation8 + $0x330] sm:$0xff]
    %v324 = vld [vmem:[#allocation8 + $0x338] sm:$0xff]
    %v325 = vld [vmem:[#allocation8 + $0x340] sm:$0xff]
    %v326 = vld [vmem:[#allocation8 + $0x348] sm:$0xff]
    %v327 = vld [vmem:[#allocation8 + $0x350] sm:$0xff]
    %v328 = vld [vmem:[#allocation8 + $0x358] sm:$0xff]
    %v329 = vld [vmem:[#allocation8 + $0x360] sm:$0xff]
    %v330 = vld [vmem:[#allocation8 + $0x368] sm:$0xff]
    %v331 = vld [vmem:[#allocation8 + $0x370] sm:$0xff]
    %v332 = vld [vmem:[#allocation8 + $0x378] sm:$0xff]
    %v333 = vld [vmem:[#allocation8 + $0x380] sm:$0xff]
    %v334 = vld [vmem:[#allocation8 + $0x388] sm:$0xff]
    %v335 = vld [vmem:[#allocation8 + $0x390] sm:$0xff]
    %v336 = vld [vmem:[#allocation8 + $0x398] sm:$0xff]
    %v337 = vld [vmem:[#allocation8 + $0x3a0] sm:$0xff]
    %v338 = vld [vmem:[#allocation8 + $0x3a8] sm:$0xff]
    %v339 = vld [vmem:[#allocation8 + $0x3b0] sm:$0xff]
    %v340 = vld [vmem:[#allocation8 + $0x3b8] sm:$0xff]
    %v341 = vld [vmem:[#allocation8 + $0x3c0] sm:$0xff]
    %v342 = vld [vmem:[#allocation8 + $0x3c8] sm:$0xff]
    %v343 = vld [vmem:[#allocation8 + $0x3d0] sm:$0xff]
    %v344 = vld [vmem:[#allocation8 + $0x3d8] sm:$0xff]
    %v345 = vld [vmem:[#allocation8 + $0x3e0] sm:$0xff]
    %v346 = vld [vmem:[#allocation8 + $0x3e8] sm:$0xff]
    %v347 = vld [vmem:[#allocation8 + $0x3f0] sm:$0xff]
    %v348 = vld [vmem:[#allocation8 + $0x3f8] sm:$0xff]
    %v349 = vld [vmem:[#allocation8 + $0x400] sm:$0xff]
    %v350 = vld [vmem:[#allocation8 + $0x408] sm:$0xff]
    %v351 = vld [vmem:[#allocation8 + $0x410] sm:$0xff]
    %v352 = vld [vmem:[#allocation8 + $0x418] sm:$0xff]
    %v353 = vld [vmem:[#allocation8 + $0x420] sm:$0xff]
    %v354 = vld [vmem:[#allocation8 + $0x428] sm:$0xff]
    %v355 = vld [vmem:[#allocation8 + $0x430] sm:$0xff]
    %v356 = vld [vmem:[#allocation8 + $0x438] sm:$0xff]
    %v357 = vld [vmem:[#allocation8 + $0x440] sm:$0xff]
    %v358 = vld [vmem:[#allocation8 + $0x448] sm:$0xff]
    %v359 = vld [vmem:[#allocation8 + $0x450] sm:$0xff]
    %v360 = vld [vmem:[#allocation8 + $0x458] sm:$0xff]
    %v361 = vld [vmem:[#allocation8 + $0x460] sm:$0xff]
    %v362 = vld [vmem:[#allocation8 + $0x468] sm:$0xff]
    %v363 = vld [vmem:[#allocation8 + $0x470] sm:$0xff]
    %v364 = vld [vmem:[#allocation8 + $0x478] sm:$0xff]
    %v365 = vld [vmem:[%s4] sm:$0x7]
    %v367 = vperm.slane %v365, 0
    %v368 = vperm.slane %v365, 1
    %v369 = vperm.slane %v365, 2
    %373 = vmatpush.msra.mxu0 %v266
    %374 = vmatpush.msra.mxu0 %v263
    %375 = vmatpush.msra.mxu0 %v260
    %376 = vmatpush.msra.mxu0 %v257
    %377 = vmatpush.msra.mxu0 %v254
    %378 = vmatpush.msra.mxu0 %v251
    %379 = vmatpush.msra.mxu0 %v248
    %380 = vmatpush.msra.mxu0 %v245
    %381 = vmatpush.msra.mxu0 %v242
    %382 = vmatpush.msra.mxu0 %v239
    %383 = vmatpush.msra.mxu0 %v236
    %384 = vmatpush.msra.mxu0 %v233
    %385 = vmatpush.msra.mxu0 %v230
    %386 = vmatpush.msra.mxu0 %v227
    %387 = vmatpush.msra.mxu0 %v224
    %388 = vmatpush.msra.mxu0 %v221
    %389 = vmatmul.f32.gmra.mxu0 %v218
    %v390 = vpop.f32.mrf.mxu0
    %v391 = vadd.f32 %v367, %v390
    %392 = vdwg.mxu0
    %393 = vmatpush.msra.mxu0 %v314
    %394 = vmatpush.msra.mxu0 %v311
    %395 = vmatpush.msra.mxu0 %v308
    %396 = vmatpush.msra.mxu0 %v305
    %397 = vmatpush.msra.mxu0 %v302
    %398 = vmatpush.msra.mxu0 %v299
    %399 = vmatpush.msra.mxu0 %v296
    %400 = vmatpush.msra.mxu0 %v293
    %401 = vmatpush.msra.mxu0 %v290
    %402 = vmatpush.msra.mxu0 %v287
    %403 = vmatpush.msra.mxu0 %v284
    %404 = vmatpush.msra.mxu0 %v281
    %405 = vmatpush.msra.mxu0 %v278
    %406 = vmatpush.msra.mxu0 %v275
    %407 = vmatpush.msra.mxu0 %v272
    %408 = vmatpush.msra.mxu0 %v269
    %409 = vmatmul.f32.gmra.mxu0 %v219
    %v410 = vpop.f32.mrf.mxu0
    %v411 = vadd.f32 %v391, %v410
    %412 = vdwg.mxu0
    %413 = vmatpush.msra.mxu0 %v362
    %414 = vmatpush.msra.mxu0 %v359
    %415 = vmatpush.msra.mxu0 %v356
    %416 = vmatpush.msra.mxu0 %v353
    %417 = vmatpush.msra.mxu0 %v350
    %418 = vmatpush.msra.mxu0 %v347
    %419 = vmatpush.msra.mxu0 %v344
    %420 = vmatpush.msra.mxu0 %v341
    %421 = vmatpush.msra.mxu0 %v338
    %422 = vmatpush.msra.mxu0 %v335
    %423 = vmatpush.msra.mxu0 %v332
    %424 = vmatpush.msra.mxu0 %v329
    %425 = vmatpush.msra.mxu0 %v326
    %426 = vmatpush.msra.mxu0 %v323
    %427 = vmatpush.msra.mxu0 %v320
    %428 = vmatpush.msra.mxu0 %v317
    %429 = vmatmul.f32.gmra.mxu0 %v220
    %v430 = vpop.f32.mrf.mxu0
    %v431 = vadd.f32 %v411, %v430
    %432 = vdwg.mxu0
    %433 = vmatpush.msra.mxu0 %v267
    %434 = vmatpush.msra.mxu0 %v264
    %435 = vmatpush.msra.mxu0 %v261
    %436 = vmatpush.msra.mxu0 %v258
    %437 = vmatpush.msra.mxu0 %v255
    %438 = vmatpush.msra.mxu0 %v252
    %439 = vmatpush.msra.mxu0 %v249
    %440 = vmatpush.msra.mxu0 %v246
    %441 = vmatpush.msra.mxu0 %v243
    %442 = vmatpush.msra.mxu0 %v240
    %443 = vmatpush.msra.mxu0 %v237
    %444 = vmatpush.msra.mxu0 %v234
    %445 = vmatpush.msra.mxu0 %v231
    %446 = vmatpush.msra.mxu0 %v228
    %447 = vmatpush.msra.mxu0 %v225
    %448 = vmatpush.msra.mxu0 %v222
    %449 = vmatmul.f32.gmra.mxu0 %v218
    %v450 = vpop.f32.mrf.mxu0
    %v451 = vadd.f32 %v368, %v450
    %452 = vdwg.mxu0
    %453 = vmatpush.msra.mxu0 %v315
    %454 = vmatpush.msra.mxu0 %v312
    %455 = vmatpush.msra.mxu0 %v309
    %456 = vmatpush.msra.mxu0 %v306
    %457 = vmatpush.msra.mxu0 %v303
    %458 = vmatpush.msra.mxu0 %v300
    %459 = vmatpush.msra.mxu0 %v297
    %460 = vmatpush.msra.mxu0 %v294
    %461 = vmatpush.msra.mxu0 %v291
    %462 = vmatpush.msra.mxu0 %v288
    %463 = vmatpush.msra.mxu0 %v285
    %464 = vmatpush.msra.mxu0 %v282
    %465 = vmatpush.msra.mxu0 %v279
    %466 = vmatpush.msra.mxu0 %v276
    %467 = vmatpush.msra.mxu0 %v273
    %468 = vmatpush.msra.mxu0 %v270
    %469 = vmatmul.f32.gmra.mxu0 %v219
    %v470 = vpop.f32.mrf.mxu0
    %v471 = vadd.f32 %v451, %v470
    %472 = vdwg.mxu0
    %473 = vmatpush.msra.mxu0 %v363
    %474 = vmatpush.msra.mxu0 %v360
    %475 = vmatpush.msra.mxu0 %v357
    %476 = vmatpush.msra.mxu0 %v354
    %477 = vmatpush.msra.mxu0 %v351
    %478 = vmatpush.msra.mxu0 %v348
    %479 = vmatpush.msra.mxu0 %v345
    %480 = vmatpush.msra.mxu0 %v342
    %481 = vmatpush.msra.mxu0 %v339
    %482 = vmatpush.msra.mxu0 %v336
    %483 = vmatpush.msra.mxu0 %v333
    %484 = vmatpush.msra.mxu0 %v330
    %485 = vmatpush.msra.mxu0 %v327
    %486 = vmatpush.msra.mxu0 %v324
    %487 = vmatpush.msra.mxu0 %v321
    %488 = vmatpush.msra.mxu0 %v318
    %489 = vmatmul.f32.gmra.mxu0 %v220
    %v490 = vpop.f32.mrf.mxu0
    %v491 = vadd.f32 %v471, %v490
    %492 = vdwg.mxu0
    %493 = vmatpush.msra.mxu0 %v268
    %494 = vmatpush.msra.mxu0 %v265
    %495 = vmatpush.msra.mxu0 %v262
    %496 = vmatpush.msra.mxu0 %v259
    %497 = vmatpush.msra.mxu0 %v256
    %498 = vmatpush.msra.mxu0 %v253
    %499 = vmatpush.msra.mxu0 %v250
    %500 = vmatpush.msra.mxu0 %v247
    %501 = vmatpush.msra.mxu0 %v244
    %502 = vmatpush.msra.mxu0 %v241
    %503 = vmatpush.msra.mxu0 %v238
    %504 = vmatpush.msra.mxu0 %v235
    %505 = vmatpush.msra.mxu0 %v232
    %506 = vmatpush.msra.mxu0 %v229
    %507 = vmatpush.msra.mxu0 %v226
    %508 = vmatpush.msra.mxu0 %v223
    %509 = vmatmul.f32.gmra.mxu0 %v218
    %v510 = vpop.f32.mrf.mxu0
    %v511 = vadd.f32 %v369, %v510
    %512 = vdwg.mxu0
    %513 = vmatpush.msra.mxu0 %v316
    %514 = vmatpush.msra.mxu0 %v313
    %515 = vmatpush.msra.mxu0 %v310
    %516 = vmatpush.msra.mxu0 %v307
    %517 = vmatpush.msra.mxu0 %v304
    %518 = vmatpush.msra.mxu0 %v301
    %519 = vmatpush.msra.mxu0 %v298
    %520 = vmatpush.msra.mxu0 %v295
    %521 = vmatpush.msra.mxu0 %v292
    %522 = vmatpush.msra.mxu0 %v289
    %523 = vmatpush.msra.mxu0 %v286
    %524 = vmatpush.msra.mxu0 %v283
    %525 = vmatpush.msra.mxu0 %v280
    %526 = vmatpush.msra.mxu0 %v277
    %527 = vmatpush.msra.mxu0 %v274
    %528 = vmatpush.msra.mxu0 %v271
    %529 = vmatmul.f32.gmra.mxu0 %v219
    %v530 = vpop.f32.mrf.mxu0
    %v531 = vadd.f32 %v511, %v530
    %532 = vdwg.mxu0
    %533 = vmatpush.msra.mxu0 %v364
    %534 = vmatpush.msra.mxu0 %v361
    %535 = vmatpush.msra.mxu0 %v358
    %536 = vmatpush.msra.mxu0 %v355
    %537 = vmatpush.msra.mxu0 %v352
    %538 = vmatpush.msra.mxu0 %v349
    %539 = vmatpush.msra.mxu0 %v346
    %540 = vmatpush.msra.mxu0 %v343
    %541 = vmatpush.msra.mxu0 %v340
    %542 = vmatpush.msra.mxu0 %v337
    %543 = vmatpush.msra.mxu0 %v334
    %544 = vmatpush.msra.mxu0 %v331
    %545 = vmatpush.msra.mxu0 %v328
    %546 = vmatpush.msra.mxu0 %v325
    %547 = vmatpush.msra.mxu0 %v322
    %548 = vmatpush.msra.mxu0 %v319
    %549 = vmatmul.f32.gmra.mxu0 %v220
    %v550 = vpop.f32.mrf.mxu0
    %v551 = vadd.f32 %v531, %v550
    %552 = vdwg.mxu0
    %v553 = vmax.f32 %v431, 0.0
    %v554 = vmax.f32 %v491, 0.0
    %v555 = vmax.f32 %v551, 0.0
    %v556 = vld [vmem:[#allocation10] sm:$0xff]
    %v557 = vld [vmem:[#allocation10 + $0x8] sm:$0xff]
    %v558 = vld [vmem:[#allocation10 + $0x10] sm:$0xff]
    %v559 = vld [vmem:[#allocation10 + $0x18] sm:$0xff]
    %v560 = vld [vmem:[#allocation10 + $0x20] sm:$0xff]
    %v561 = vld [vmem:[#allocation10 + $0x28] sm:$0xff]
    %v562 = vld [vmem:[#allocation10 + $0x30] sm:$0xff]
    %v563 = vld [vmem:[#allocation10 + $0x38] sm:$0xff]
    %v564 = vld [vmem:[#allocation10 + $0x40] sm:$0xff]
    %v565 = vld [vmem:[#allocation10 + $0x48] sm:$0xff]
    %v566 = vld [vmem:[#allocation10 + $0x50] sm:$0xff]
    %v567 = vld [vmem:[#allocation10 + $0x58] sm:$0xff]
    %v568 = vld [vmem:[#allocation10 + $0x60] sm:$0xff]
    %v569 = vld [vmem:[#allocation10 + $0x68] sm:$0xff]
    %v570 = vld [vmem:[#allocation10 + $0x70] sm:$0xff]
    %v571 = vld [vmem:[#allocation10 + $0x78] sm:$0xff]
    %v572 = vld [vmem:[#allocation10 + $0x80] sm:$0xff]
    %v573 = vld [vmem:[#allocation10 + $0x88] sm:$0xff]
    %v574 = vld [vmem:[#allocation10 + $0x90] sm:$0xff]
    %v575 = vld [vmem:[#allocation10 + $0x98] sm:$0xff]
    %v576 = vld [vmem:[#allocation10 + $0xa0] sm:$0xff]
    %v577 = vld [vmem:[#allocation10 + $0xa8] sm:$0xff]
    %v578 = vld [vmem:[#allocation10 + $0xb0] sm:$0xff]
    %v579 = vld [vmem:[#allocation10 + $0xb8] sm:$0xff]
    %v580 = vld [vmem:[#allocation10 + $0xc0] sm:$0xff]
    %v581 = vld [vmem:[#allocation10 + $0xc8] sm:$0xff]
    %v582 = vld [vmem:[#allocation10 + $0xd0] sm:$0xff]
    %v583 = vld [vmem:[#allocation10 + $0xd8] sm:$0xff]
    %v584 = vld [vmem:[#allocation10 + $0xe0] sm:$0xff]
    %v585 = vld [vmem:[#allocation10 + $0xe8] sm:$0xff]
    %v586 = vld [vmem:[#allocation10 + $0xf0] sm:$0xff]
    %v587 = vld [vmem:[#allocation10 + $0xf8] sm:$0xff]
    %v588 = vld [vmem:[#allocation10 + $0x100] sm:$0xff]
    %v589 = vld [vmem:[#allocation10 + $0x108] sm:$0xff]
    %v590 = vld [vmem:[#allocation10 + $0x110] sm:$0xff]
    %v591 = vld [vmem:[#allocation10 + $0x118] sm:$0xff]
    %v592 = vld [vmem:[#allocation10 + $0x120] sm:$0xff]
    %v593 = vld [vmem:[#allocation10 + $0x128] sm:$0xff]
    %v594 = vld [vmem:[#allocation10 + $0x130] sm:$0xff]
    %v595 = vld [vmem:[#allocation10 + $0x138] sm:$0xff]
    %v596 = vld [vmem:[#allocation10 + $0x140] sm:$0xff]
    %v597 = vld [vmem:[#allocation10 + $0x148] sm:$0xff]
    %v598 = vld [vmem:[#allocation10 + $0x150] sm:$0xff]
    %v599 = vld [vmem:[#allocation10 + $0x158] sm:$0xff]
    %v600 = vld [vmem:[#allocation10 + $0x160] sm:$0xff]
    %v601 = vld [vmem:[#allocation10 + $0x168] sm:$0xff]
    %v602 = vld [vmem:[#allocation10 + $0x170] sm:$0xff]
    %v603 = vld [vmem:[#allocation10 + $0x178] sm:$0xff]
    %v604 = vld [vmem:[%s6] sm:$0x1]
    %v606 = vperm.slane %v604, 0
    %608 = vmatpush.msra.mxu0 %v571
    %609 = vmatpush.msra.mxu0 %v570
    %610 = vmatpush.msra.mxu0 %v569
    %611 = vmatpush.msra.mxu0 %v568
    %612 = vmatpush.msra.mxu0 %v567
    %613 = vmatpush.msra.mxu0 %v566
    %614 = vmatpush.msra.mxu0 %v565
    %615 = vmatpush.msra.mxu0 %v564
    %616 = vmatpush.msra.mxu0 %v563
    %617 = vmatpush.msra.mxu0 %v562
    %618 = vmatpush.msra.mxu0 %v561
    %619 = vmatpush.msra.mxu0 %v560
    %620 = vmatpush.msra.mxu0 %v559
    %621 = vmatpush.msra.mxu0 %v558
    %622 = vmatpush.msra.mxu0 %v557
    %623 = vmatpush.msra.mxu0 %v556
    %624 = vmatmul.f32.gmra.mxu0 %v553
    %v625 = vpop.f32.mrf.mxu0
    %v626 = vadd.f32 %v606, %v625
    %627 = vdwg.mxu0
    %628 = vmatpush.msra.mxu0 %v587
    %629 = vmatpush.msra.mxu0 %v586
    %630 = vmatpush.msra.mxu0 %v585
    %631 = vmatpush.msra.mxu0 %v584
    %632 = vmatpush.msra.mxu0 %v583
    %633 = vmatpush.msra.mxu0 %v582
    %634 = vmatpush.msra.mxu0 %v581
    %635 = vmatpush.msra.mxu0 %v580
    %636 = vmatpush.msra.mxu0 %v579
    %637 = vmatpush.msra.mxu0 %v578
    %638 = vmatpush.msra.mxu0 %v577
    %639 = vmatpush.msra.mxu0 %v576
    %640 = vmatpush.msra.mxu0 %v575
    %641 = vmatpush.msra.mxu0 %v574
    %642 = vmatpush.msra.mxu0 %v573
    %643 = vmatpush.msra.mxu0 %v572
    %644 = vmatmul.f32.gmra.mxu0 %v554
    %v645 = vpop.f32.mrf.mxu0
    %v646 = vadd.f32 %v626, %v645
    %647 = vdwg.mxu0
    %648 = vmatpush.msra.mxu0 %v603
    %649 = vmatpush.msra.mxu0 %v602
    %650 = vmatpush.msra.mxu0 %v601
    %651 = vmatpush.msra.mxu0 %v600
    %652 = vmatpush.msra.mxu0 %v599
    %653 = vmatpush.msra.mxu0 %v598
    %654 = vmatpush.msra.mxu0 %v597
    %655 = vmatpush.msra.mxu0 %v596
    %656 = vmatpush.msra.mxu0 %v595
    %657 = vmatpush.msra.mxu0 %v594
    %658 = vmatpush.msra.mxu0 %v593
    %659 = vmatpush.msra.mxu0 %v592
    %660 = vmatpush.msra.mxu0 %v591
    %661 = vmatpush.msra.mxu0 %v590
    %662 = vmatpush.msra.mxu0 %v589
    %663 = vmatpush.msra.mxu0 %v588
    %664 = vmatmul.f32.gmra.mxu0 %v555
    %v665 = vpop.f32.mrf.mxu0
    %v666 = vadd.f32 %v646, %v665
    %667 = vdwg.mxu0
    %v668 = vsub.f32 0.0, %v666
    %v669 = vmul.f32 %v668, 1.442695
    %v670 = vpow.pop %v669
    %v671 = vadd.f32 %v670, 1.0
    %v672 = vrcp.pop %v671
    %v673 = vmul.f32 %v671, %v672
    %v674 = vsub.f32 1.0, %v673
    %v675 = vmul.f32 %v672, %v674
    %v676 = vadd.f32 %v672, %v675
    %vm677 = vweird.f32 %v671
    %vm678 = vweird.f32 %v672
    %vm679 = vmor %vm677, %vm678
    %v680 = vsel %vm679, %v672, %v676
    %v681 = vand.u32 2147483647, %v671
    %vm682 = vcmp.eq.f32.partialorder %v681, 8.507059e+37
    %v683 = vand.u32 %v671, 2147483648
    %v684 = vor.u32 1.1754944e-38, %v683
    %v685 = vsel %vm682, %v684, %v680
    %v686 = vmul.f32 1.0, %v685
    %687 = vst [vmem:[#allocation11] sm:$0xff] %v686
    // Predicated region
    $region50: #{tpu_custom_call.1} parent=1 // pred_check
      _
    $region51: #{tpu_custom_call.1} parent=1 // pred_check_branch
      %689 = sbr.rel (0) target = $region53
    $region52: #{tpu_custom_call.1} parent=1 // pred_region
      %691 = vsyncadd [#allocation4], 0
      %s693 = sshll.u32 [#allocation11], 4
      %s694 = int_to_ptr.vmem [resolvable:$true] %s693
      %s695 = sshll.u32 %s7, 4
      %s696 = int_to_ptr.hbm [resolvable:$true] %s695
      %698 = dma.vmem_to_hbm [thread:$0]  %s694, 128, %s696, [#allocation4]
    $region53: #{tpu_custom_call.1} parent=1 // pred_fallthru
      _
    // Predicated region
    $region54: #{tpu_custom_call.1} parent=1 // pred_check
      _
    $region55: #{tpu_custom_call.1} parent=1 // pred_check_branch
      %700 = sbr.rel (0) target = $region57
    $region56: #{tpu_custom_call.1} parent=1 // pred_region
      %702 = dma.done [#allocation4], 128
    $region57: #{tpu_custom_call.1} parent=1 // pred_fallthru
      _
    %703 = vsyncpa [#allocation3], 1
    %704 = vsyncpa [#allocation6], 1
    %705 = vsyncpa [#allocation9], 1
    %706 = vsyncpa [#allocation4], 1

// kernel: tpu_custom_call.1
$region0: #{tpu_custom_call.1}
  #allocation0 [shape = 'u32[]', space=smem, size = 0x4, offset = 0x4, fixed_abs, tag = 'smem constant byte address 0x4 - core index']
  #allocation1 [shape = 'u32[72,128]{1,0:T(1,128)}', space=vmem, size = 0x9000, scoped, tag = 'internal scratch']
  %s0 = inlined_call_operand.hbm [shape: f32[8,128], index: 0, kind: input, shape index: {}]
  %s1 = inlined_call_operand.hbm [shape: f32[128,384], index: 1, kind: input, shape index: {}]
  %s2 = inlined_call_operand.hbm [shape: f32[1,384], index: 2, kind: input, shape index: {}]
  %s3 = inlined_call_operand.hbm [shape: f32[384,384], index: 3, kind: input, shape index: {}]
  %s4 = inlined_call_operand.vmem [shape: f32[1,384], index: 4, kind: input, shape index: {}]
  %s5 = inlined_call_operand.hbm [shape: f32[384,128], index: 5, kind: input, shape index: {}]
  %s6 = inlined_call_operand.vmem [shape: f32[1,128], index: 6, kind: input, shape index: {}]
  %s7 = inlined_call_operand.hbm [shape: f32[8,128], index: 7, kind: output, shape index: {}]
  %s8 = sld [smem:[#allocation0]]
  $region58: #{tpu_custom_call.1} parent=0
    _
  %s10 = ssub.s32 1, %s8
  %s11 = scalar_select 0, %s10, %s8
  $region1: #{tpu_custom_call.1} parent=0
    #allocation2 [shape = 'u8[4096]{0}', space=vmem, size = 0x1000, scoped, tag = 'input window, operand 0, single buffered']
    #allocation3 [shape = 's32[1]{0}', space=sflag, size = 0x4, scoped, tag = 'scoped memory for tpu_custom_call.1']
    #allocation4 [shape = 's32[1]{0}', space=sflag, size = 0x4, scoped, tag = 'scoped memory for tpu_custom_call.1']
    #allocation5 [shape = 'u8[196608]{0}', space=vmem, size = 0x30000, scoped, tag = 'input window, operand 1, single buffered']
    #allocation6 [shape = 's32[1]{0}', space=sflag, size = 0x4, scoped, tag = 'scoped memory for tpu_custom_call.1']
    #allocation7 [shape = 'u8[1536]{0}', space=vmem, size = 0x800, scoped, tag = 'input window, operand 2, single buffered']
    #allocation8 [shape = 'u8[589824]{0}', space=vmem, size = 0x90000, scoped, tag = 'input window, operand 3, single buffered']
    #allocation9 [shape = 's32[1]{0}', space=sflag, size = 0x4, scoped, tag = 'scoped memory for tpu_custom_call.1']
    #allocation10 [shape = 'u8[196608]{0}', space=vmem, size = 0x30000, scoped, tag = 'input window, operand 5, single buffered']
    #allocation11 [shape = 'u8[4096]{0}', space=vmem, size = 0x1000, scoped, tag = 'output window, operand 0, single buffered']
    %12 = vsyncpa [#allocation3], 0
    %13 = vsyncpa [#allocation6], 0
    %14 = vsyncpa [#allocation9], 0
    %15 = vsyncpa [#allocation4], 0
    // Predicated region
    $region2: #{tpu_custom_call.1} parent=1 // pred_check
      _
    $region3: #{tpu_custom_call.1} parent=1 // pred_check_branch
      %17 = sbr.rel (0) target = $region5
    $region4: #{tpu_custom_call.1} parent=1 // pred_region
      %19 = vsyncadd [#allocation3], 0
      %s21 = sshll.u32 %s0, 4
      %s22 = int_to_ptr.hbm [resolvable:$true] %s21
      %s23 = sshll.u32 [#allocation2], 4
      %s24 = int_to_ptr.vmem [resolvable:$true] %s23
      %26 = dma.hbm_to_vmem [thread:$0]  %s22, 128, %s24, [#allocation3]
    $region5: #{tpu_custom_call.1} parent=1 // pred_fallthru
      _
    // Predicated region
    $region6: #{tpu_custom_call.1} parent=1 // pred_check
      _
    $region7: #{tpu_custom_call.1} parent=1 // pred_check_branch
      %28 = sbr.rel (0) target = $region9
    $region8: #{tpu_custom_call.1} parent=1 // pred_region
      %30 = vsyncadd [#allocation6], 0
      %s31 = sshll.u32 %s1, 4
      %s32 = int_to_ptr.hbm [resolvable:$true] %s31
      %s33 = sshll.u32 [#allocation5], 4
      %s34 = int_to_ptr.vmem [resolvable:$true] %s33
      %39 = dma.hbm_to_vmem [thread:$0]  %s32, 6144, %s34, [#allocation6], 384, 384, 24
    $region9: #{tpu_custom_call.1} parent=1 // pred_fallthru
      _
    // Predicated region
    $region10: #{tpu_custom_call.1} parent=1 // pred_check
      _
    $region11: #{tpu_custom_call.1} parent=1 // pred_check_branch
      %41 = sbr.rel (0) target = $region13
    $region12: #{tpu_custom_call.1} parent=1 // pred_region
      %43 = vsyncadd [#allocation6], 0
      %s45 = sshll.u32 %s2, 4
      %s46 = int_to_ptr.hbm [resolvable:$true] %s45
      %s47 = sshll.u32 [#allocation7], 4
      %s48 = int_to_ptr.vmem [resolvable:$true] %s47
      %50 = dma.hbm_to_vmem [thread:$0]  %s46, 48, %s48, [#allocation6]
    $region13: #{tpu_custom_call.1} parent=1 // pred_fallthru
      _
    // Predicated region
    $region14: #{tpu_custom_call.1} parent=1 // pred_check
      _
    $region15: #{tpu_custom_call.1} parent=1 // pred_check_branch
      %52 = sbr.rel (0) target = $region17
    $region16: #{tpu_custom_call.1} parent=1 // pred_region
      %54 = vsyncadd [#allocation9], 0
      %s55 = sshll.u32 %s3, 4
      %s56 = int_to_ptr.hbm [resolvable:$true] %s55
      %s57 = sshll.u32 [#allocation8], 4
      %s58 = int_to_ptr.vmem [resolvable:$true] %s57
      %63 = dma.hbm_to_vmem [thread:$0]  %s56, 18432, %s58, [#allocation9], 384, 384, 24
    $region17: #{tpu_custom_call.1} parent=1 // pred_fallthru
      _
    // Predicated region
    $region18: #{tpu_custom_call.1} parent=1 // pred_check
      _
    $region19: #{tpu_custom_call.1} parent=1 // pred_check_branch
      %65 = sbr.rel (0) target = $region21
    $region20: #{tpu_custom_call.1} parent=1 // pred_region
      _
    $region21: #{tpu_custom_call.1} parent=1 // pred_fallthru
      _
    // Predicated region
    $region22: #{tpu_custom_call.1} parent=1 // pred_check
      _
    $region23: #{tpu_custom_call.1} parent=1 // pred_check_branch
      %67 = sbr.rel (0) target = $region25
    $region24: #{tpu_custom_call.1} parent=1 // pred_region
      %69 = vsyncadd [#allocation9], 0
      %s70 = sshll.u32 %s5, 4
      %s71 = int_to_ptr.hbm [resolvable:$true] %s70
      %s72 = sshll.u32 [#allocation10], 4
      %s73 = int_to_ptr.vmem [resolvable:$true] %s72
      %78 = dma.hbm_to_vmem [thread:$0]  %s71, 6144, %s73, [#allocation9], 128, 128, 8
    $region25: #{tpu_custom_call.1} parent=1 // pred_fallthru
      _
    // Predicated region
    $region26: #{tpu_custom_call.1} parent=1 // pred_check
      _
    $region27: #{tpu_custom_call.1} parent=1 // pred_check_branch
      %80 = sbr.rel (0) target = $region29
    $region28: #{tpu_custom_call.1} parent=1 // pred_region
      _
    $region29: #{tpu_custom_call.1} parent=1 // pred_fallthru
      _
    // Predicated region
    $region30: #{tpu_custom_call.1} parent=1 // pred_check
      _
    $region31: #{tpu_custom_call.1} parent=1 // pred_check_branch
      %82 = sbr.rel (0) target = $region33
    $region32: #{tpu_custom_call.1} parent=1 // pred_region
      %84 = dma.done [#allocation3], 128
    $region33: #{tpu_custom_call.1} parent=1 // pred_fallthru
      _
    // Predicated region
    $region34: #{tpu_custom_call.1} parent=1 // pred_check
      _
    $region35: #{tpu_custom_call.1} parent=1 // pred_check_branch
      %86 = sbr.rel (0) target = $region37
    $region36: #{tpu_custom_call.1} parent=1 // pred_region
      %88 = dma.done [#allocation6], 6144
    $region37: #{tpu_custom_call.1} parent=1 // pred_fallthru
      _
    // Predicated region
    $region38: #{tpu_custom_call.1} parent=1 // pred_check
      _
    $region39: #{tpu_custom_call.1} parent=1 // pred_check_branch
      %90 = sbr.rel (0) target = $region41
    $region40: #{tpu_custom_call.1} parent=1 // pred_region
      %92 = dma.done [#allocation6], 48
    $region41: #{tpu_custom_call.1} parent=1 // pred_fallthru
      _
    // Predicated region
    $region42: #{tpu_custom_call.1} parent=1 // pred_check
      _
    $region43: #{tpu_custom_call.1} parent=1 // pred_check_branch
      %94 = sbr.rel (0) target = $region45
    $region44: #{tpu_custom_call.1} parent=1 // pred_region
      %96 = dma.done [#allocation9], 18432
    $region45: #{tpu_custom_call.1} parent=1 // pred_fallthru
      _
    // Predicated region
    $region46: #{tpu_custom_call.1} parent=1 // pred_check
      _
    $region47: #{tpu_custom_call.1} parent=1 // pred_check_branch
      %98 = sbr.rel (0) target = $region49
    $region48: #{tpu_custom_call.1} parent=1 // pred_region
      %100 = dma.done [#allocation9], 6144
    $region49: #{tpu_custom_call.1} parent=1 // pred_fallthru
      _
    %v101 = vld [vmem:[#allocation2] sm:$0xff]
    %v102 = vld [vmem:[#allocation5] sm:$0xff]
    %v103 = vld [vmem:[#allocation5 + $0x8] sm:$0xff]
    %v104 = vld [vmem:[#allocation5 + $0x10] sm:$0xff]
    %v105 = vld [vmem:[#allocation5 + $0x18] sm:$0xff]
    %v106 = vld [vmem:[#allocation5 + $0x20] sm:$0xff]
    %v107 = vld [vmem:[#allocation5 + $0x28] sm:$0xff]
    %v108 = vld [vmem:[#allocation5 + $0x30] sm:$0xff]
    %v109 = vld [vmem:[#allocation5 + $0x38] sm:$0xff]
    %v110 = vld [vmem:[#allocation5 + $0x40] sm:$0xff]
    %v111 = vld [vmem:[#allocation5 + $0x48] sm:$0xff]
    %v112 = vld [vmem:[#allocation5 + $0x50] sm:$0xff]
    %v113 = vld [vmem:[#allocation5 + $0x58] sm:$0xff]
    %v114 = vld [vmem:[#allocation5 + $0x60] sm:$0xff]
    %v115 = vld [vmem:[#allocation5 + $0x68] sm:$0xff]
    %v116 = vld [vmem:[#allocation5 + $0x70] sm:$0xff]
    %v117 = vld [vmem:[#allocation5 + $0x78] sm:$0xff]
    %v118 = vld [vmem:[#allocation5 + $0x80] sm:$0xff]
    %v119 = vld [vmem:[#allocation5 + $0x88] sm:$0xff]
    %v120 = vld [vmem:[#allocation5 + $0x90] sm:$0xff]
    %v121 = vld [vmem:[#allocation5 + $0x98] sm:$0xff]
    %v122 = vld [vmem:[#allocation5 + $0xa0] sm:$0xff]
    %v123 = vld [vmem:[#allocation5 + $0xa8] sm:$0xff]
    %v124 = vld [vmem:[#allocation5 + $0xb0] sm:$0xff]
    %v125 = vld [vmem:[#allocation5 + $0xb8] sm:$0xff]
    %v126 = vld [vmem:[#allocation5 + $0xc0] sm:$0xff]
    %v127 = vld [vmem:[#allocation5 + $0xc8] sm:$0xff]
    %v128 = vld [vmem:[#allocation5 + $0xd0] sm:$0xff]
    %v129 = vld [vmem:[#allocation5 + $0xd8] sm:$0xff]
    %v130 = vld [vmem:[#allocation5 + $0xe0] sm:$0xff]
    %v131 = vld [vmem:[#allocation5 + $0xe8] sm:$0xff]
    %v132 = vld [vmem:[#allocation5 + $0xf0] sm:$0xff]
    %v133 = vld [vmem:[#allocation5 + $0xf8] sm:$0xff]
    %v134 = vld [vmem:[#allocation5 + $0x100] sm:$0xff]
    %v135 = vld [vmem:[#allocation5 + $0x108] sm:$0xff]
    %v136 = vld [vmem:[#allocation5 + $0x110] sm:$0xff]
    %v137 = vld [vmem:[#allocation5 + $0x118] sm:$0xff]
    %v138 = vld [vmem:[#allocation5 + $0x120] sm:$0xff]
    %v139 = vld [vmem:[#allocation5 + $0x128] sm:$0xff]
    %v140 = vld [vmem:[#allocation5 + $0x130] sm:$0xff]
    %v141 = vld [vmem:[#allocation5 + $0x138] sm:$0xff]
    %v142 = vld [vmem:[#allocation5 + $0x140] sm:$0xff]
    %v143 = vld [vmem:[#allocation5 + $0x148] sm:$0xff]
    %v144 = vld [vmem:[#allocation5 + $0x150] sm:$0xff]
    %v145 = vld [vmem:[#allocation5 + $0x158] sm:$0xff]
    %v146 = vld [vmem:[#allocation5 + $0x160] sm:$0xff]
    %v147 = vld [vmem:[#allocation5 + $0x168] sm:$0xff]
    %v148 = vld [vmem:[#allocation5 + $0x170] sm:$0xff]
    %v149 = vld [vmem:[#allocation5 + $0x178] sm:$0xff]
    %v150 = vld [vmem:[#allocation7] sm:$0x7]
    %v152 = vperm.slane %v150, 0
    %v153 = vperm.slane %v150, 1
    %v154 = vperm.slane %v150, 2
    %158 = vmatpush.msra.mxu0 %v147
    %159 = vmatpush.msra.mxu0 %v144
    %160 = vmatpush.msra.mxu0 %v141
    %161 = vmatpush.msra.mxu0 %v138
    %162 = vmatpush.msra.mxu0 %v135
    %163 = vmatpush.msra.mxu0 %v132
    %164 = vmatpush.msra.mxu0 %v129
    %165 = vmatpush.msra.mxu0 %v126
    %166 = vmatpush.msra.mxu0 %v123
    %167 = vmatpush.msra.mxu0 %v120
    %168 = vmatpush.msra.mxu0 %v117
    %169 = vmatpush.msra.mxu0 %v114
    %170 = vmatpush.msra.mxu0 %v111
    %171 = vmatpush.msra.mxu0 %v108
    %172 = vmatpush.msra.mxu0 %v105
    %173 = vmatpush.msra.mxu0 %v102
    %174 = vmatmul.f32.gmra.mxu0 %v101
    %v175 = vpop.f32.mrf.mxu0
    %v176 = vadd.f32 %v152, %v175
    %177 = vdwg.mxu0
    %178 = vmatpush.msra.mxu0 %v148
    %179 = vmatpush.msra.mxu0 %v145
    %180 = vmatpush.msra.mxu0 %v142
    %181 = vmatpush.msra.mxu0 %v139
    %182 = vmatpush.msra.mxu0 %v136
    %183 = vmatpush.msra.mxu0 %v133
    %184 = vmatpush.msra.mxu0 %v130
    %185 = vmatpush.msra.mxu0 %v127
    %186 = vmatpush.msra.mxu0 %v124
    %187 = vmatpush.msra.mxu0 %v121
    %188 = vmatpush.msra.mxu0 %v118
    %189 = vmatpush.msra.mxu0 %v115
    %190 = vmatpush.msra.mxu0 %v112
    %191 = vmatpush.msra.mxu0 %v109
    %192 = vmatpush.msra.mxu0 %v106
    %193 = vmatpush.msra.mxu0 %v103
    %194 = vmatmul.f32.gmra.mxu0 %v101
    %v195 = vpop.f32.mrf.mxu0
    %v196 = vadd.f32 %v153, %v195
    %197 = vdwg.mxu0
    %198 = vmatpush.msra.mxu0 %v149
    %199 = vmatpush.msra.mxu0 %v146
    %200 = vmatpush.msra.mxu0 %v143
    %201 = vmatpush.msra.mxu0 %v140
    %202 = vmatpush.msra.mxu0 %v137
    %203 = vmatpush.msra.mxu0 %v134
    %204 = vmatpush.msra.mxu0 %v131
    %205 = vmatpush.msra.mxu0 %v128
    %206 = vmatpush.msra.mxu0 %v125
    %207 = vmatpush.msra.mxu0 %v122
    %208 = vmatpush.msra.mxu0 %v119
    %209 = vmatpush.msra.mxu0 %v116
    %210 = vmatpush.msra.mxu0 %v113
    %211 = vmatpush.msra.mxu0 %v110
    %212 = vmatpush.msra.mxu0 %v107
    %213 = vmatpush.msra.mxu0 %v104
    %214 = vmatmul.f32.gmra.mxu0 %v101
    %v215 = vpop.f32.mrf.mxu0
    %v216 = vadd.f32 %v154, %v215
    %217 = vdwg.mxu0
    %v218 = vmax.f32 %v176, 0.0
    %v219 = vmax.f32 %v196, 0.0
    %v220 = vmax.f32 %v216, 0.0
    %v221 = vld [vmem:[#allocation8] sm:$0xff]
    %v222 = vld [vmem:[#allocation8 + $0x8] sm:$0xff]
    %v223 = vld [vmem:[#allocation8 + $0x10] sm:$0xff]
    %v224 = vld [vmem:[#allocation8 + $0x18] sm:$0xff]
    %v225 = vld [vmem:[#allocation8 + $0x20] sm:$0xff]
    %v226 = vld [vmem:[#allocation8 + $0x28] sm:$0xff]
    %v227 = vld [vmem:[#allocation8 + $0x30] sm:$0xff]
    %v228 = vld [vmem:[#allocation8 + $0x38] sm:$0xff]
    %v229 = vld [vmem:[#allocation8 + $0x40] sm:$0xff]
    %v230 = vld [vmem:[#allocation8 + $0x48] sm:$0xff]
    %v231 = vld [vmem:[#allocation8 + $0x50] sm:$0xff]
    %v232 = vld [vmem:[#allocation8 + $0x58] sm:$0xff]
    %v233 = vld [vmem:[#allocation8 + $0x60] sm:$0xff]
    %v234 = vld [vmem:[#allocation8 + $0x68] sm:$0xff]
    %v235 = vld [vmem:[#allocation8 + $0x70] sm:$0xff]
    %v236 = vld [vmem:[#allocation8 + $0x78] sm:$0xff]
    %v237 = vld [vmem:[#allocation8 + $0x80] sm:$0xff]
    %v238 = vld [vmem:[#allocation8 + $0x88] sm:$0xff]
    %v239 = vld [vmem:[#allocation8 + $0x90] sm:$0xff]
    %v240 = vld [vmem:[#allocation8 + $0x98] sm:$0xff]
    %v241 = vld [vmem:[#allocation8 + $0xa0] sm:$0xff]
    %v242 = vld [vmem:[#allocation8 + $0xa8] sm:$0xff]
    %v243 = vld [vmem:[#allocation8 + $0xb0] sm:$0xff]
    %v244 = vld [vmem:[#allocation8 + $0xb8] sm:$0xff]
    %v245 = vld [vmem:[#allocation8 + $0xc0] sm:$0xff]
    %v246 = vld [vmem:[#allocation8 + $0xc8] sm:$0xff]
    %v247 = vld [vmem:[#allocation8 + $0xd0] sm:$0xff]
    %v248 = vld [vmem:[#allocation8 + $0xd8] sm:$0xff]
    %v249 = vld [vmem:[#allocation8 + $0xe0] sm:$0xff]
    %v250 = vld [vmem:[#allocation8 + $0xe8] sm:$0xff]
    %v251 = vld [vmem:[#allocation8 + $0xf0] sm:$0xff]
    %v252 = vld [vmem:[#allocation8 + $0xf8] sm:$0xff]
    %v253 = vld [vmem:[#allocation8 + $0x100] sm:$0xff]
    %v254 = vld [vmem:[#allocation8 + $0x108] sm:$0xff]
    %v255 = vld [vmem:[#allocation8 + $0x110] sm:$0xff]
    %v256 = vld [vmem:[#allocation8 + $0x118] sm:$0xff]
    %v257 = vld [vmem:[#allocation8 + $0x120] sm:$0xff]
    %v258 = vld [vmem:[#allocation8 + $0x128] sm:$0xff]
    %v259 = vld [vmem:[#allocation8 + $0x130] sm:$0xff]
    %v260 = vld [vmem:[#allocation8 + $0x138] sm:$0xff]
    %v261 = vld [vmem:[#allocation8 + $0x140] sm:$0xff]
    %v262 = vld [vmem:[#allocation8 + $0x148] sm:$0xff]
    %v263 = vld [vmem:[#allocation8 + $0x150] sm:$0xff]
    %v264 = vld [vmem:[#allocation8 + $0x158] sm:$0xff]
    %v265 = vld [vmem:[#allocation8 + $0x160] sm:$0xff]
    %v266 = vld [vmem:[#allocation8 + $0x168] sm:$0xff]
    %v267 = vld [vmem:[#allocation8 + $0x170] sm:$0xff]
    %v268 = vld [vmem:[#allocation8 + $0x178] sm:$0xff]
    %v269 = vld [vmem:[#allocation8 + $0x180] sm:$0xff]
    %v270 = vld [vmem:[#allocation8 + $0x188] sm:$0xff]
    %v271 = vld [vmem:[#allocation8 + $0x190] sm:$0xff]
    %v272 = vld [vmem:[#allocation8 + $0x198] sm:$0xff]
    %v273 = vld [vmem:[#allocation8 + $0x1a0] sm:$0xff]
    %v274 = vld [vmem:[#allocation8 + $0x1a8] sm:$0xff]
    %v275 = vld [vmem:[#allocation8 + $0x1b0] sm:$0xff]
    %v276 = vld [vmem:[#allocation8 + $0x1b8] sm:$0xff]
    %v277 = vld [vmem:[#allocation8 + $0x1c0] sm:$0xff]
    %v278 = vld [vmem:[#allocation8 + $0x1c8] sm:$0xff]
    %v279 = vld [vmem:[#allocation8 + $0x1d0] sm:$0xff]
    %v280 = vld [vmem:[#allocation8 + $0x1d8] sm:$0xff]
    %v281 = vld [vmem:[#allocation8 + $0x1e0] sm:$0xff]
    %v282 = vld [vmem:[#allocation8 + $0x1e8] sm:$0xff]
    %v283 = vld [vmem:[#allocation8 + $0x1f0] sm:$0xff]
    %v284 = vld [vmem:[#allocation8 + $0x1f8] sm:$0xff]
    %v285 = vld [vmem:[#allocation8 + $0x200] sm:$0xff]
    %v286 = vld [vmem:[#allocation8 + $0x208] sm:$0xff]
    %v287 = vld [vmem:[#allocation8 + $0x210] sm:$0xff]
    %v288 = vld [vmem:[#allocation8 + $0x218] sm:$0xff]
    %v289 = vld [vmem:[#allocation8 + $0x220] sm:$0xff]
    %v290 = vld [vmem:[#allocation8 + $0x228] sm:$0xff]
    %v291 = vld [vmem:[#allocation8 + $0x230] sm:$0xff]
    %v292 = vld [vmem:[#allocation8 + $0x238] sm:$0xff]
    %v293 = vld [vmem:[#allocation8 + $0x240] sm:$0xff]
    %v294 = vld [vmem:[#allocation8 + $0x248] sm:$0xff]
    %v295 = vld [vmem:[#allocation8 + $0x250] sm:$0xff]
    %v296 = vld [vmem:[#allocation8 + $0x258] sm:$0xff]
    %v297 = vld [vmem:[#allocation8 + $0x260] sm:$0xff]
    %v298 = vld [vmem:[#allocation8 + $0x268] sm:$0xff]
    %v299 = vld [vmem:[#allocation8 + $0x270] sm:$0xff]
    %v300 = vld [vmem:[#allocation8 + $0x278] sm:$0xff]
    %v301 = vld [vmem:[#allocation8 + $0x280] sm:$0xff]
    %v302 = vld [vmem:[#allocation8 + $0x288] sm:$0xff]
    %v303 = vld [vmem:[#allocation8 + $0x290] sm:$0xff]
    %v304 = vld [vmem:[#allocation8 + $0x298] sm:$0xff]
    %v305 = vld [vmem:[#allocation8 + $0x2a0] sm:$0xff]
    %v306 = vld [vmem:[#allocation8 + $0x2a8] sm:$0xff]
    %v307 = vld [vmem:[#allocation8 + $0x2b0] sm:$0xff]
    %v308 = vld [vmem:[#allocation8 + $0x2b8] sm:$0xff]
    %v309 = vld [vmem:[#allocation8 + $0x2c0] sm:$0xff]
    %v310 = vld [vmem:[#allocation8 + $0x2c8] sm:$0xff]
    %v311 = vld [vmem:[#allocation8 + $0x2d0] sm:$0xff]
    %v312 = vld [vmem:[#allocation8 + $0x2d8] sm:$0xff]
    %v313 = vld [vmem:[#allocation8 + $0x2e0] sm:$0xff]
    %v314 = vld [vmem:[#allocation8 + $0x2e8] sm:$0xff]
    %v315 = vld [vmem:[#allocation8 + $0x2f0] sm:$0xff]
    %v316 = vld [vmem:[#allocation8 + $0x2f8] sm:$0xff]
    %v317 = vld [vmem:[#allocation8 + $0x300] sm:$0xff]
    %v318 = vld [vmem:[#allocation8 + $0x308] sm:$0xff]
    %v319 = vld [vmem:[#allocation8 + $0x310] sm:$0xff]
    %v320 = vld [vmem:[#allocation8 + $0x318] sm:$0xff]
    %v321 = vld [vmem:[#allocation8 + $0x320] sm:$0xff]
    %v322 = vld [vmem:[#allocation8 + $0x328] sm:$0xff]
    %v323 = vld [vmem:[#allocation8 + $0x330] sm:$0xff]
    %v324 = vld [vmem:[#allocation8 + $0x338] sm:$0xff]
    %v325 = vld [vmem:[#allocation8 + $0x340] sm:$0xff]
    %v326 = vld [vmem:[#allocation8 + $0x348] sm:$0xff]
    %v327 = vld [vmem:[#allocation8 + $0x350] sm:$0xff]
    %v328 = vld [vmem:[#allocation8 + $0x358] sm:$0xff]
    %v329 = vld [vmem:[#allocation8 + $0x360] sm:$0xff]
    %v330 = vld [vmem:[#allocation8 + $0x368] sm:$0xff]
    %v331 = vld [vmem:[#allocation8 + $0x370] sm:$0xff]
    %v332 = vld [vmem:[#allocation8 + $0x378] sm:$0xff]
    %v333 = vld [vmem:[#allocation8 + $0x380] sm:$0xff]
    %v334 = vld [vmem:[#allocation8 + $0x388] sm:$0xff]
    %v335 = vld [vmem:[#allocation8 + $0x390] sm:$0xff]
    %v336 = vld [vmem:[#allocation8 + $0x398] sm:$0xff]
    %v337 = vld [vmem:[#allocation8 + $0x3a0] sm:$0xff]
    %v338 = vld [vmem:[#allocation8 + $0x3a8] sm:$0xff]
    %v339 = vld [vmem:[#allocation8 + $0x3b0] sm:$0xff]
    %v340 = vld [vmem:[#allocation8 + $0x3b8] sm:$0xff]
    %v341 = vld [vmem:[#allocation8 + $0x3c0] sm:$0xff]
    %v342 = vld [vmem:[#allocation8 + $0x3c8] sm:$0xff]
    %v343 = vld [vmem:[#allocation8 + $0x3d0] sm:$0xff]
    %v344 = vld [vmem:[#allocation8 + $0x3d8] sm:$0xff]
    %v345 = vld [vmem:[#allocation8 + $0x3e0] sm:$0xff]
    %v346 = vld [vmem:[#allocation8 + $0x3e8] sm:$0xff]
    %v347 = vld [vmem:[#allocation8 + $0x3f0] sm:$0xff]
    %v348 = vld [vmem:[#allocation8 + $0x3f8] sm:$0xff]
    %v349 = vld [vmem:[#allocation8 + $0x400] sm:$0xff]
    %v350 = vld [vmem:[#allocation8 + $0x408] sm:$0xff]
    %v351 = vld [vmem:[#allocation8 + $0x410] sm:$0xff]
    %v352 = vld [vmem:[#allocation8 + $0x418] sm:$0xff]
    %v353 = vld [vmem:[#allocation8 + $0x420] sm:$0xff]
    %v354 = vld [vmem:[#allocation8 + $0x428] sm:$0xff]
    %v355 = vld [vmem:[#allocation8 + $0x430] sm:$0xff]
    %v356 = vld [vmem:[#allocation8 + $0x438] sm:$0xff]
    %v357 = vld [vmem:[#allocation8 + $0x440] sm:$0xff]
    %v358 = vld [vmem:[#allocation8 + $0x448] sm:$0xff]
    %v359 = vld [vmem:[#allocation8 + $0x450] sm:$0xff]
    %v360 = vld [vmem:[#allocation8 + $0x458] sm:$0xff]
    %v361 = vld [vmem:[#allocation8 + $0x460] sm:$0xff]
    %v362 = vld [vmem:[#allocation8 + $0x468] sm:$0xff]
    %v363 = vld [vmem:[#allocation8 + $0x470] sm:$0xff]
    %v364 = vld [vmem:[#allocation8 + $0x478] sm:$0xff]
    %v365 = vld [vmem:[%s4] sm:$0x7]
    %v367 = vperm.slane %v365, 0
    %v368 = vperm.slane %v365, 1
    %v369 = vperm.slane %v365, 2
    %373 = vmatpush.msra.mxu0 %v266
    %374 = vmatpush.msra.mxu0 %v263
    %375 = vmatpush.msra.mxu0 %v260
    %376 = vmatpush.msra.mxu0 %v257
    %377 = vmatpush.msra.mxu0 %v254
    %378 = vmatpush.msra.mxu0 %v251
    %379 = vmatpush.msra.mxu0 %v248
    %380 = vmatpush.msra.mxu0 %v245
    %381 = vmatpush.msra.mxu0 %v242
    %382 = vmatpush.msra.mxu0 %v239
    %383 = vmatpush.msra.mxu0 %v236
    %384 = vmatpush.msra.mxu0 %v233
    %385 = vmatpush.msra.mxu0 %v230
    %386 = vmatpush.msra.mxu0 %v227
    %387 = vmatpush.msra.mxu0 %v224
    %388 = vmatpush.msra.mxu0 %v221
    %389 = vmatmul.f32.gmra.mxu0 %v218
    %v390 = vpop.f32.mrf.mxu0
    %v391 = vadd.f32 %v367, %v390
    %392 = vdwg.mxu0
    %393 = vmatpush.msra.mxu0 %v314
    %394 = vmatpush.msra.mxu0 %v311
    %395 = vmatpush.msra.mxu0 %v308
    %396 = vmatpush.msra.mxu0 %v305
    %397 = vmatpush.msra.mxu0 %v302
    %398 = vmatpush.msra.mxu0 %v299
    %399 = vmatpush.msra.mxu0 %v296
    %400 = vmatpush.msra.mxu0 %v293
    %401 = vmatpush.msra.mxu0 %v290
    %402 = vmatpush.msra.mxu0 %v287
    %403 = vmatpush.msra.mxu0 %v284
    %404 = vmatpush.msra.mxu0 %v281
    %405 = vmatpush.msra.mxu0 %v278
    %406 = vmatpush.msra.mxu0 %v275
    %407 = vmatpush.msra.mxu0 %v272
    %408 = vmatpush.msra.mxu0 %v269
    %409 = vmatmul.f32.gmra.mxu0 %v219
    %v410 = vpop.f32.mrf.mxu0
    %v411 = vadd.f32 %v391, %v410
    %412 = vdwg.mxu0
    %413 = vmatpush.msra.mxu0 %v362
    %414 = vmatpush.msra.mxu0 %v359
    %415 = vmatpush.msra.mxu0 %v356
    %416 = vmatpush.msra.mxu0 %v353
    %417 = vmatpush.msra.mxu0 %v350
    %418 = vmatpush.msra.mxu0 %v347
    %419 = vmatpush.msra.mxu0 %v344
    %420 = vmatpush.msra.mxu0 %v341
    %421 = vmatpush.msra.mxu0 %v338
    %422 = vmatpush.msra.mxu0 %v335
    %423 = vmatpush.msra.mxu0 %v332
    %424 = vmatpush.msra.mxu0 %v329
    %425 = vmatpush.msra.mxu0 %v326
    %426 = vmatpush.msra.mxu0 %v323
    %427 = vmatpush.msra.mxu0 %v320
    %428 = vmatpush.msra.mxu0 %v317
    %429 = vmatmul.f32.gmra.mxu0 %v220
    %v430 = vpop.f32.mrf.mxu0
    %v431 = vadd.f32 %v411, %v430
    %432 = vdwg.mxu0
    %433 = vmatpush.msra.mxu0 %v267
    %434 = vmatpush.msra.mxu0 %v264
    %435 = vmatpush.msra.mxu0 %v261
    %436 = vmatpush.msra.mxu0 %v258
    %437 = vmatpush.msra.mxu0 %v255
    %438 = vmatpush.msra.mxu0 %v252
    %439 = vmatpush.msra.mxu0 %v249
    %440 = vmatpush.msra.mxu0 %v246
    %441 = vmatpush.msra.mxu0 %v243
    %442 = vmatpush.msra.mxu0 %v240
    %443 = vmatpush.msra.mxu0 %v237
    %444 = vmatpush.msra.mxu0 %v234
    %445 = vmatpush.msra.mxu0 %v231
    %446 = vmatpush.msra.mxu0 %v228
    %447 = vmatpush.msra.mxu0 %v225
    %448 = vmatpush.msra.mxu0 %v222
    %449 = vmatmul.f32.gmra.mxu0 %v218
    %v450 = vpop.f32.mrf.mxu0
    %v451 = vadd.f32 %v368, %v450
    %452 = vdwg.mxu0
    %453 = vmatpush.msra.mxu0 %v315
    %454 = vmatpush.msra.mxu0 %v312
    %455 = vmatpush.msra.mxu0 %v309
    %456 = vmatpush.msra.mxu0 %v306
    %457 = vmatpush.msra.mxu0 %v303
    %458 = vmatpush.msra.mxu0 %v300
    %459 = vmatpush.msra.mxu0 %v297
    %460 = vmatpush.msra.mxu0 %v294
    %461 = vmatpush.msra.mxu0 %v291
    %462 = vmatpush.msra.mxu0 %v288
    %463 = vmatpush.msra.mxu0 %v285
    %464 = vmatpush.msra.mxu0 %v282
    %465 = vmatpush.msra.mxu0 %v279
    %466 = vmatpush.msra.mxu0 %v276
    %467 = vmatpush.msra.mxu0 %v273
    %468 = vmatpush.msra.mxu0 %v270
    %469 = vmatmul.f32.gmra.mxu0 %v219
    %v470 = vpop.f32.mrf.mxu0
    %v471 = vadd.f32 %v451, %v470
    %472 = vdwg.mxu0
    %473 = vmatpush.msra.mxu0 %v363
    %474 = vmatpush.msra.mxu0 %v360
    %475 = vmatpush.msra.mxu0 %v357
    %476 = vmatpush.msra.mxu0 %v354
    %477 = vmatpush.msra.mxu0 %v351
    %478 = vmatpush.msra.mxu0 %v348
    %479 = vmatpush.msra.mxu0 %v345
    %480 = vmatpush.msra.mxu0 %v342
    %481 = vmatpush.msra.mxu0 %v339
    %482 = vmatpush.msra.mxu0 %v336
    %483 = vmatpush.msra.mxu0 %v333
    %484 = vmatpush.msra.mxu0 %v330
    %485 = vmatpush.msra.mxu0 %v327
    %486 = vmatpush.msra.mxu0 %v324
    %487 = vmatpush.msra.mxu0 %v321
    %488 = vmatpush.msra.mxu0 %v318
    %489 = vmatmul.f32.gmra.mxu0 %v220
    %v490 = vpop.f32.mrf.mxu0
    %v491 = vadd.f32 %v471, %v490
    %492 = vdwg.mxu0
    %493 = vmatpush.msra.mxu0 %v268
    %494 = vmatpush.msra.mxu0 %v265
    %495 = vmatpush.msra.mxu0 %v262
    %496 = vmatpush.msra.mxu0 %v259
    %497 = vmatpush.msra.mxu0 %v256
    %498 = vmatpush.msra.mxu0 %v253
    %499 = vmatpush.msra.mxu0 %v250
    %500 = vmatpush.msra.mxu0 %v247
    %501 = vmatpush.msra.mxu0 %v244
    %502 = vmatpush.msra.mxu0 %v241
    %503 = vmatpush.msra.mxu0 %v238
    %504 = vmatpush.msra.mxu0 %v235
    %505 = vmatpush.msra.mxu0 %v232
    %506 = vmatpush.msra.mxu0 %v229
    %507 = vmatpush.msra.mxu0 %v226
    %508 = vmatpush.msra.mxu0 %v223
    %509 = vmatmul.f32.gmra.mxu0 %v218
    %v510 = vpop.f32.mrf.mxu0
    %v511 = vadd.f32 %v369, %v510
    %512 = vdwg.mxu0
    %513 = vmatpush.msra.mxu0 %v316
    %514 = vmatpush.msra.mxu0 %v313
    %515 = vmatpush.msra.mxu0 %v310
    %516 = vmatpush.msra.mxu0 %v307
    %517 = vmatpush.msra.mxu0 %v304
    %518 = vmatpush.msra.mxu0 %v301
    %519 = vmatpush.msra.mxu0 %v298
    %520 = vmatpush.msra.mxu0 %v295
    %521 = vmatpush.msra.mxu0 %v292
    %522 = vmatpush.msra.mxu0 %v289
    %523 = vmatpush.msra.mxu0 %v286
    %524 = vmatpush.msra.mxu0 %v283
    %525 = vmatpush.msra.mxu0 %v280
    %526 = vmatpush.msra.mxu0 %v277
    %527 = vmatpush.msra.mxu0 %v274
    %528 = vmatpush.msra.mxu0 %v271
    %529 = vmatmul.f32.gmra.mxu0 %v219
    %v530 = vpop.f32.mrf.mxu0
    %v531 = vadd.f32 %v511, %v530
    %532 = vdwg.mxu0
    %533 = vmatpush.msra.mxu0 %v364
    %534 = vmatpush.msra.mxu0 %v361
    %535 = vmatpush.msra.mxu0 %v358
    %536 = vmatpush.msra.mxu0 %v355
    %537 = vmatpush.msra.mxu0 %v352
    %538 = vmatpush.msra.mxu0 %v349
    %539 = vmatpush.msra.mxu0 %v346
    %540 = vmatpush.msra.mxu0 %v343
    %541 = vmatpush.msra.mxu0 %v340
    %542 = vmatpush.msra.mxu0 %v337
    %543 = vmatpush.msra.mxu0 %v334
    %544 = vmatpush.msra.mxu0 %v331
    %545 = vmatpush.msra.mxu0 %v328
    %546 = vmatpush.msra.mxu0 %v325
    %547 = vmatpush.msra.mxu0 %v322
    %548 = vmatpush.msra.mxu0 %v319
    %549 = vmatmul.f32.gmra.mxu0 %v220
    %v550 = vpop.f32.mrf.mxu0
    %v551 = vadd.f32 %v531, %v550
    %552 = vdwg.mxu0
    %v553 = vmax.f32 %v431, 0.0
    %v554 = vmax.f32 %v491, 0.0
    %v555 = vmax.f32 %v551, 0.0
    %v556 = vld [vmem:[#allocation10] sm:$0xff]
    %v557 = vld [vmem:[#allocation10 + $0x8] sm:$0xff]
    %v558 = vld [vmem:[#allocation10 + $0x10] sm:$0xff]
    %v559 = vld [vmem:[#allocation10 + $0x18] sm:$0xff]
    %v560 = vld [vmem:[#allocation10 + $0x20] sm:$0xff]
    %v561 = vld [vmem:[#allocation10 + $0x28] sm:$0xff]
    %v562 = vld [vmem:[#allocation10 + $0x30] sm:$0xff]
    %v563 = vld [vmem:[#allocation10 + $0x38] sm:$0xff]
    %v564 = vld [vmem:[#allocation10 + $0x40] sm:$0xff]
    %v565 = vld [vmem:[#allocation10 + $0x48] sm:$0xff]
    %v566 = vld [vmem:[#allocation10 + $0x50] sm:$0xff]
    %v567 = vld [vmem:[#allocation10 + $0x58] sm:$0xff]
    %v568 = vld [vmem:[#allocation10 + $0x60] sm:$0xff]
    %v569 = vld [vmem:[#allocation10 + $0x68] sm:$0xff]
    %v570 = vld [vmem:[#allocation10 + $0x70] sm:$0xff]
    %v571 = vld [vmem:[#allocation10 + $0x78] sm:$0xff]
    %v572 = vld [vmem:[#allocation10 + $0x80] sm:$0xff]
    %v573 = vld [vmem:[#allocation10 + $0x88] sm:$0xff]
    %v574 = vld [vmem:[#allocation10 + $0x90] sm:$0xff]
    %v575 = vld [vmem:[#allocation10 + $0x98] sm:$0xff]
    %v576 = vld [vmem:[#allocation10 + $0xa0] sm:$0xff]
    %v577 = vld [vmem:[#allocation10 + $0xa8] sm:$0xff]
    %v578 = vld [vmem:[#allocation10 + $0xb0] sm:$0xff]
    %v579 = vld [vmem:[#allocation10 + $0xb8] sm:$0xff]
    %v580 = vld [vmem:[#allocation10 + $0xc0] sm:$0xff]
    %v581 = vld [vmem:[#allocation10 + $0xc8] sm:$0xff]
    %v582 = vld [vmem:[#allocation10 + $0xd0] sm:$0xff]
    %v583 = vld [vmem:[#allocation10 + $0xd8] sm:$0xff]
    %v584 = vld [vmem:[#allocation10 + $0xe0] sm:$0xff]
    %v585 = vld [vmem:[#allocation10 + $0xe8] sm:$0xff]
    %v586 = vld [vmem:[#allocation10 + $0xf0] sm:$0xff]
    %v587 = vld [vmem:[#allocation10 + $0xf8] sm:$0xff]
    %v588 = vld [vmem:[#allocation10 + $0x100] sm:$0xff]
    %v589 = vld [vmem:[#allocation10 + $0x108] sm:$0xff]
    %v590 = vld [vmem:[#allocation10 + $0x110] sm:$0xff]
    %v591 = vld [vmem:[#allocation10 + $0x118] sm:$0xff]
    %v592 = vld [vmem:[#allocation10 + $0x120] sm:$0xff]
    %v593 = vld [vmem:[#allocation10 + $0x128] sm:$0xff]
    %v594 = vld [vmem:[#allocation10 + $0x130] sm:$0xff]
    %v595 = vld [vmem:[#allocation10 + $0x138] sm:$0xff]
    %v596 = vld [vmem:[#allocation10 + $0x140] sm:$0xff]
    %v597 = vld [vmem:[#allocation10 + $0x148] sm:$0xff]
    %v598 = vld [vmem:[#allocation10 + $0x150] sm:$0xff]
    %v599 = vld [vmem:[#allocation10 + $0x158] sm:$0xff]
    %v600 = vld [vmem:[#allocation10 + $0x160] sm:$0xff]
    %v601 = vld [vmem:[#allocation10 + $0x168] sm:$0xff]
    %v602 = vld [vmem:[#allocation10 + $0x170] sm:$0xff]
    %v603 = vld [vmem:[#allocation10 + $0x178] sm:$0xff]
    %v604 = vld [vmem:[%s6] sm:$0x1]
    %v606 = vperm.slane %v604, 0
    %608 = vmatpush.msra.mxu0 %v571
    %609 = vmatpush.msra.mxu0 %v570
    %610 = vmatpush.msra.mxu0 %v569
    %611 = vmatpush.msra.mxu0 %v568
    %612 = vmatpush.msra.mxu0 %v567
    %613 = vmatpush.msra.mxu0 %v566
    %614 = vmatpush.msra.mxu0 %v565
    %615 = vmatpush.msra.mxu0 %v564
    %616 = vmatpush.msra.mxu0 %v563
    %617 = vmatpush.msra.mxu0 %v562
    %618 = vmatpush.msra.mxu0 %v561
    %619 = vmatpush.msra.mxu0 %v560
    %620 = vmatpush.msra.mxu0 %v559
    %621 = vmatpush.msra.mxu0 %v558
    %622 = vmatpush.msra.mxu0 %v557
    %623 = vmatpush.msra.mxu0 %v556
    %624 = vmatmul.f32.gmra.mxu0 %v553
    %v625 = vpop.f32.mrf.mxu0
    %v626 = vadd.f32 %v606, %v625
    %627 = vdwg.mxu0
    %628 = vmatpush.msra.mxu0 %v587
    %629 = vmatpush.msra.mxu0 %v586
    %630 = vmatpush.msra.mxu0 %v585
    %631 = vmatpush.msra.mxu0 %v584
    %632 = vmatpush.msra.mxu0 %v583
    %633 = vmatpush.msra.mxu0 %v582
    %634 = vmatpush.msra.mxu0 %v581
    %635 = vmatpush.msra.mxu0 %v580
    %636 = vmatpush.msra.mxu0 %v579
    %637 = vmatpush.msra.mxu0 %v578
    %638 = vmatpush.msra.mxu0 %v577
    %639 = vmatpush.msra.mxu0 %v576
    %640 = vmatpush.msra.mxu0 %v575
    %641 = vmatpush.msra.mxu0 %v574
    %642 = vmatpush.msra.mxu0 %v573
    %643 = vmatpush.msra.mxu0 %v572
    %644 = vmatmul.f32.gmra.mxu0 %v554
    %v645 = vpop.f32.mrf.mxu0
    %v646 = vadd.f32 %v626, %v645
    %647 = vdwg.mxu0
    %648 = vmatpush.msra.mxu0 %v603
    %649 = vmatpush.msra.mxu0 %v602
    %650 = vmatpush.msra.mxu0 %v601
    %651 = vmatpush.msra.mxu0 %v600
    %652 = vmatpush.msra.mxu0 %v599
    %653 = vmatpush.msra.mxu0 %v598
    %654 = vmatpush.msra.mxu0 %v597
    %655 = vmatpush.msra.mxu0 %v596
    %656 = vmatpush.msra.mxu0 %v595
    %657 = vmatpush.msra.mxu0 %v594
    %658 = vmatpush.msra.mxu0 %v593
    %659 = vmatpush.msra.mxu0 %v592
    %660 = vmatpush.msra.mxu0 %v591
    %661 = vmatpush.msra.mxu0 %v590
    %662 = vmatpush.msra.mxu0 %v589
    %663 = vmatpush.msra.mxu0 %v588
    %664 = vmatmul.f32.gmra.mxu0 %v555
    %v665 = vpop.f32.mrf.mxu0
    %v666 = vadd.f32 %v646, %v665
    %667 = vdwg.mxu0
    %v668 = vsub.f32 0.0, %v666
    %v669 = vmul.f32 %v668, 1.442695
    %v670 = vpow.pop %v669
    %v671 = vadd.f32 %v670, 1.0
    %v672 = vrcp.pop %v671
    %v673 = vmul.f32 %v671, %v672
    %v674 = vsub.f32 1.0, %v673
    %v675 = vmul.f32 %v672, %v674
    %v676 = vadd.f32 %v672, %v675
    %vm677 = vweird.f32 %v671
    %vm678 = vweird.f32 %v672
    %vm679 = vmor %vm677, %vm678
    %v680 = vsel %vm679, %v672, %v676
    %v681 = vand.u32 2147483647, %v671
    %vm682 = vcmp.eq.f32.partialorder %v681, 8.507059e+37
    %v683 = vand.u32 %v671, 2147483648
    %v684 = vor.u32 1.1754944e-38, %v683
    %v685 = vsel %vm682, %v684, %v680
    %v686 = vmul.f32 1.0, %v685
    %687 = vst [vmem:[#allocation11] sm:$0xff] %v686
    // Predicated region
    $region50: #{tpu_custom_call.1} parent=1 // pred_check
      _
    $region51: #{tpu_custom_call.1} parent=1 // pred_check_branch
      %689 = sbr.rel (0) target = $region53
    $region52: #{tpu_custom_call.1} parent=1 // pred_region
      %691 = vsyncadd [#allocation4], 0
      %s693 = sshll.u32 [#allocation11], 4
      %s694 = int_to_ptr.vmem [resolvable:$true] %s693
      %s695 = sshll.u32 %s7, 4
      %s696 = int_to_ptr.hbm [resolvable:$true] %s695
      %698 = dma.vmem_to_hbm [thread:$0]  %s694, 128, %s696, [#allocation4]
    $region53: #{tpu_custom_call.1} parent=1 // pred_fallthru
      _
    // Predicated region
    $region54: #{tpu_custom_call.1} parent=1 // pred_check
      _
    $region55: #{tpu_custom_call.1} parent=1 // pred_check_branch
      %700 = sbr.rel (0) target = $region57
    $region56: #{tpu_custom_call.1} parent=1 // pred_region
      %702 = dma.done [#allocation4], 128
    $region57: #{tpu_custom_call.1} parent=1 // pred_fallthru
      _
    %703 = vsyncpa [#allocation3], 1
    %704 = vsyncpa [#allocation6], 1
    %705 = vsyncpa [#allocation9], 1
    %706 = vsyncpa [#allocation4], 1

</llo_original>
